<compile_context>
chip_gen: v6e
topology: v6e:2x2x1
jax: 0.10.0
libtpu: 0.0.40
codegen_flags: <defaults>
</compile_context>

<pallas_src>
import jax
import jax.numpy as jnp
from jax.experimental import pallas as pl
from jax.experimental.pallas import tpu as pltpu

HIDDEN = 256   # fixed by the module definition
LANE = 128     # TPU lane width


def make_pnet_kernel(env_min: float, env_max: float):
    scale = (env_max - env_min) * 0.5
    offset = scale + env_min   # (pi + 1) * scale + env_min == pi * scale + offset

    def pnet_kernel(x_ref, w1_ref, b1_ref, w2_ref, b2_ref, w3_ref, b3_ref, o_ref):
        # layer 1: bf16 MXU matmul, f32 accumulate; bias + ReLU in f32 on the VPU
        h1 = jnp.dot(x_ref[...], w1_ref[...], preferred_element_type=jnp.float32)
        h1 = jnp.maximum(h1 + b1_ref[...], 0.0)

        # layer 2: bf16 MXU matmul, f32 accumulate
        h2 = jnp.dot(h1.astype(jnp.bfloat16), w2_ref[...],
                     preferred_element_type=jnp.float32)
        h2 = jnp.maximum(h2 + b2_ref[...], 0.0)

        # policy layer computed transposed: (1, 256) @ (256, TB) -> (1, TB)
        # so the output store is lane-dense (XLU transpose slot is otherwise idle).
        z = jnp.dot(w3_ref[...], h2.T, preferred_element_type=jnp.float32)
        pi = jnp.tanh(z + b3_ref[...])            # f32 on the EUP
        o_ref[0] = pi * scale + offset            # fused rescale to [env_min, env_max]

    return pnet_kernel


def pnet_forward(x, params, env_bounds, *, block_b=512):
    """x: [B, input_dim] float32. Returns pi: [B, 1] float32 in [env_min, env_max]."""
    env_min, env_max = float(env_bounds[0]), float(env_bounds[1])
    w1, b1, w2, b2, w3, b3 = params
    B, D = x.shape

    d_pad = pl.cdiv(D, LANE) * LANE                # layer-1 K padded to a full lane width
    b_pad = pl.cdiv(B, block_b) * block_b          # batch padded to whole tiles
    num_tiles = b_pad // block_b

    # zero padding is an exact no-op through the Linear layers
    x_p = jnp.zeros((b_pad, d_pad), jnp.float32).at[:B, :D].set(x)
    w1_p = jnp.zeros((d_pad, HIDDEN), jnp.float32).at[:D, :].set(w1)

    # bf16 operands for the big MXU matmuls (accumulation stays f32 in-kernel);
    # w3 is tiny and stays f32 for the (1, 256) policy matmul.
    x_b = x_p.astype(jnp.bfloat16)
    w1_b = w1_p.astype(jnp.bfloat16)
    w2_b = w2.astype(jnp.bfloat16)

    kernel = make_pnet_kernel(env_min, env_max)

    # weights/biases: constant index_map -> fetched once, VMEM-resident
    const = lambda shape: pl.BlockSpec(shape, lambda i: tuple(0 for _ in shape))

    cost = pl.CostEstimate(
        flops=2 * b_pad * (d_pad * HIDDEN + HIDDEN * HIDDEN + HIDDEN),
        transcendentals=b_pad,
        bytes_accessed=(x_b.size * 2 + w1_b.size * 2 + w2_b.size * 2
                        + (w3.size + b1.size + b2.size + b3.size) * 4
                        + b_pad * 4),
    )

    out = pl.pallas_call(
        kernel,
        out_shape=jax.ShapeDtypeStruct((num_tiles, 1, block_b), jnp.float32),
        grid=(num_tiles,),
        in_specs=[
            pl.BlockSpec((block_b, d_pad), lambda i: (i, 0)),     # x: tiled over batch
            const((d_pad, HIDDEN)),  const((1, HIDDEN)),          # w1, b1 (resident)
            const((HIDDEN, HIDDEN)), const((1, HIDDEN)),          # w2, b2 (resident)
            const((1, HIDDEN)),      const((1, 1)),               # w3 row, b3 (resident)
        ],
        out_specs=pl.BlockSpec((1, 1, block_b), lambda i: (i, 0, 0)),
        compiler_params=pltpu.CompilerParams(
            dimension_semantics=("parallel",),     # shard batch tiles across TCs on v7x
            vmem_limit_bytes=32 * 1024 * 1024,     # well within v7x's 64 MiB physical
        ),
        cost_estimate=cost,
    )(x_b, w1_b, b1, w2_b, b2, w3, b3)

    # (num_tiles, 1, TB) lane-dense rows -> (B, 1) column, dropping batch padding
    return out.reshape(-1)[:B].reshape(B, 1)


def init_params(key, input_dim):
    """Deterministic synthetic parameters (shapes match the nn.Module)."""
    ks = jax.random.split(key, 6)
    # w1/w2 stored [in, out] (transposed vs torch Linear); w3 kept as [out=1, in=256].
    w1 = jax.random.normal(ks[0], (input_dim, HIDDEN), jnp.float32) * 0.05
    b1 = jax.random.normal(ks[1], (1, HIDDEN), jnp.float32) * 0.05
    w2 = jax.random.normal(ks[2], (HIDDEN, HIDDEN), jnp.float32) * 0.05
    b2 = jax.random.normal(ks[3], (1, HIDDEN), jnp.float32) * 0.05
    w3 = jax.random.normal(ks[4], (1, HIDDEN), jnp.float32) * 0.05
    b3 = jax.random.normal(ks[5], (1, 1), jnp.float32) * 0.05
    return w1, b1, w2, b2, w3, b3


def pnet_forward_ref(x, params, env_bounds):
    """Pure-JAX f32 reference for sanity checking."""
    env_min, env_max = env_bounds
    w1, b1, w2, b2, w3, b3 = params
    h1 = jnp.maximum(x @ w1 + b1, 0.0)
    h2 = jnp.maximum(h1 @ w2 + b2, 0.0)
    pi = jnp.tanh(h2 @ w3.T + b3)
    return (pi + 1.0) * (env_max - env_min) / 2.0 + env_min


if __name__ == "__main__":
    key = jax.random.PRNGKey(0)
    k_x, k_p = jax.random.split(key)

    batch = 8
    input_dim = 32
    env_bounds = (-2.0, 2.0)  # e.g. Pendulum-like action bounds

    x = jax.random.normal(k_x, (batch, input_dim), jnp.float32)
    params = init_params(k_p, input_dim)

    pi = pnet_forward(x, params, env_bounds)
    pi = jax.block_until_ready(pi)

    ref = pnet_forward_ref(x, params, env_bounds)
    assert pi.shape == (batch, 1)
    # bf16 MXU operands (f32 accumulate) vs pure-f32 reference -> loose tolerance
    assert jnp.allclose(pi, ref, atol=2e-2, rtol=0.0), "mismatch vs reference"
    assert bool(jnp.all(pi >= env_bounds[0]) & jnp.all(pi <= env_bounds[1]))

    print("KERNEL_OK")
</pallas_src>

<mosaic_0001>
module attributes {stable_mosaic.version = 11 : i64} {
  func.func @pnet_kernel(%arg0: i32, %arg1: memref<512x128xbf16, #tpu.memory_space<vmem>>, %arg2: memref<128x256xbf16, #tpu.memory_space<vmem>>, %arg3: memref<1x256xf32, #tpu.memory_space<vmem>>, %arg4: memref<256x256xbf16, #tpu.memory_space<vmem>>, %arg5: memref<1x256xf32, #tpu.memory_space<vmem>>, %arg6: memref<1x256xf32, #tpu.memory_space<vmem>>, %arg7: memref<1x1xf32, #tpu.memory_space<vmem>>, %arg8: memref<1x1x512xf32, #tpu.memory_space<vmem>>) attributes {dimension_semantics = [#tpu.dimension_semantics<parallel>], iteration_bounds = array<i64: 1>, scalar_prefetch = 0 : i64, scratch_operands = 0 : i64, tpu.core_type = #tpu.core_type<tc>, window_params = [{transform_indices = @transform_0, window_bounds = array<i64: 512, 128>}, {pipeline_mode = #tpu.pipeline_mode<synchronous>, transform_indices = @transform_1, window_bounds = array<i64: 128, 256>}, {pipeline_mode = #tpu.pipeline_mode<synchronous>, transform_indices = @transform_2, window_bounds = array<i64: 1, 256>}, {pipeline_mode = #tpu.pipeline_mode<synchronous>, transform_indices = @transform_3, window_bounds = array<i64: 256, 256>}, {pipeline_mode = #tpu.pipeline_mode<synchronous>, transform_indices = @transform_4, window_bounds = array<i64: 1, 256>}, {pipeline_mode = #tpu.pipeline_mode<synchronous>, transform_indices = @transform_5, window_bounds = array<i64: 1, 256>}, {pipeline_mode = #tpu.pipeline_mode<synchronous>, transform_indices = @transform_6, window_bounds = array<i64: 1, 1>}, {transform_indices = @transform_7, window_bounds = array<i64: 1, 1, 512>}]} {
    %c0 = arith.constant 0 : index
    %c0_0 = arith.constant 0 : index
    %0 = vector.load %arg1[%c0, %c0_0] : memref<512x128xbf16, #tpu.memory_space<vmem>>, vector<512x128xbf16>
    %c0_1 = arith.constant 0 : index
    %c0_2 = arith.constant 0 : index
    %1 = vector.load %arg2[%c0_1, %c0_2] : memref<128x256xbf16, #tpu.memory_space<vmem>>, vector<128x256xbf16>
    %cst = arith.constant dense<0.000000e+00> : vector<512x256xf32>
    %2 = tpu.matmul %0, %1, %cst {dimension_numbers = #tpu.dot_dimension_numbers<[1], [0], [0], [1], [0, 0, 1, 1], [], []>} : vector<512x128xbf16>, vector<128x256xbf16>, vector<512x256xf32> -> vector<512x256xf32>
    %c0_3 = arith.constant 0 : index
    %c0_4 = arith.constant 0 : index
    %3 = vector.load %arg3[%c0_3, %c0_4] : memref<1x256xf32, #tpu.memory_space<vmem>>, vector<1x256xf32>
    %4 = vector.broadcast %3 : vector<1x256xf32> to vector<512x256xf32>
    %5 = arith.addf %2, %4 : vector<512x256xf32>
    %cst_5 = arith.constant 0.000000e+00 : f32
    %6 = vector.broadcast %cst_5 : f32 to vector<512x256xf32>
    %7 = arith.maximumf %5, %6 : vector<512x256xf32>
    %8 = arith.truncf %7 : vector<512x256xf32> to vector<512x256xbf16>
    %c0_6 = arith.constant 0 : index
    %c0_7 = arith.constant 0 : index
    %9 = vector.load %arg4[%c0_6, %c0_7] : memref<256x256xbf16, #tpu.memory_space<vmem>>, vector<256x256xbf16>
    %cst_8 = arith.constant dense<0.000000e+00> : vector<512x256xf32>
    %10 = tpu.matmul %8, %9, %cst_8 {dimension_numbers = #tpu.dot_dimension_numbers<[1], [0], [0], [1], [0, 0, 1, 1], [], []>} : vector<512x256xbf16>, vector<256x256xbf16>, vector<512x256xf32> -> vector<512x256xf32>
    %c0_9 = arith.constant 0 : index
    %c0_10 = arith.constant 0 : index
    %11 = vector.load %arg5[%c0_9, %c0_10] : memref<1x256xf32, #tpu.memory_space<vmem>>, vector<1x256xf32>
    %12 = vector.broadcast %11 : vector<1x256xf32> to vector<512x256xf32>
    %13 = arith.addf %10, %12 : vector<512x256xf32>
    %cst_11 = arith.constant 0.000000e+00 : f32
    %14 = vector.broadcast %cst_11 : f32 to vector<512x256xf32>
    %15 = arith.maximumf %13, %14 : vector<512x256xf32>
    %c0_12 = arith.constant 0 : index
    %c0_13 = arith.constant 0 : index
    %16 = vector.load %arg6[%c0_12, %c0_13] : memref<1x256xf32, #tpu.memory_space<vmem>>, vector<1x256xf32>
    %17 = tpu.transpose %15, [1, 0] : vector<512x256xf32> -> vector<256x512xf32>
    %cst_14 = arith.constant dense<0.000000e+00> : vector<1x512xf32>
    %18 = tpu.matmul %16, %17, %cst_14 {dimension_numbers = #tpu.dot_dimension_numbers<[1], [0], [0], [1], [0, 0, 1, 1], [], []>} : vector<1x256xf32>, vector<256x512xf32>, vector<1x512xf32> -> vector<1x512xf32>
    %c0_15 = arith.constant 0 : index
    %c0_16 = arith.constant 0 : index
    %19 = vector.load %arg7[%c0_15, %c0_16] : memref<1x1xf32, #tpu.memory_space<vmem>>, vector<1x1xf32>
    %20 = vector.broadcast %19 : vector<1x1xf32> to vector<1x512xf32>
    %21 = arith.addf %18, %20 : vector<1x512xf32>
    %22 = math.tanh %21 : vector<1x512xf32>
    %cst_17 = arith.constant 2.000000e+00 : f32
    %23 = vector.broadcast %cst_17 : f32 to vector<1x512xf32>
    %24 = arith.mulf %22, %23 : vector<1x512xf32>
    %cst_18 = arith.constant 0.000000e+00 : f32
    %25 = vector.broadcast %cst_18 : f32 to vector<1x512xf32>
    %26 = arith.addf %24, %25 : vector<1x512xf32>
    %c0_19 = arith.constant 0 : index
    %c0_20 = arith.constant 0 : index
    %c0_21 = arith.constant 0 : index
    %27 = vector.load %arg8[%c0_19, %c0_20, %c0_21] : memref<1x1x512xf32, #tpu.memory_space<vmem>>, vector<1x1x512xf32>
    %28 = vector.shape_cast %27 : vector<1x1x512xf32> to vector<1x512xf32>
    %29 = vector.shape_cast %26 : vector<1x512xf32> to vector<1x1x512xf32>
    tpu.vector_store %arg8[%c0_19, %c0_20, %c0_21], %29 {strides = array<i32>} : memref<1x1x512xf32, #tpu.memory_space<vmem>>, vector<1x1x512xf32>,
    return
  }
  func.func @transform_0(%arg0: i32) -> (i32, i32) {
    %c0_i32 = arith.constant 0 : i32
    %c0_i32_0 = arith.constant 0 : i32
    return %arg0, %c0_i32 : i32, i32
  }
  func.func @transform_1(%arg0: i32) -> (i32, i32) {
    %c0_i32 = arith.constant 0 : i32
    %c0_i32_0 = arith.constant 0 : i32
    %c0_i32_1 = arith.constant 0 : i32
    return %c0_i32, %c0_i32_0 : i32, i32
  }
  func.func @transform_2(%arg0: i32) -> (i32, i32) {
    %c0_i32 = arith.constant 0 : i32
    %c0_i32_0 = arith.constant 0 : i32
    %c0_i32_1 = arith.constant 0 : i32
    return %c0_i32, %c0_i32_0 : i32, i32
  }
  func.func @transform_3(%arg0: i32) -> (i32, i32) {
    %c0_i32 = arith.constant 0 : i32
    %c0_i32_0 = arith.constant 0 : i32
    %c0_i32_1 = arith.constant 0 : i32
    return %c0_i32, %c0_i32_0 : i32, i32
  }
  func.func @transform_4(%arg0: i32) -> (i32, i32) {
    %c0_i32 = arith.constant 0 : i32
    %c0_i32_0 = arith.constant 0 : i32
    %c0_i32_1 = arith.constant 0 : i32
    return %c0_i32, %c0_i32_0 : i32, i32
  }
  func.func @transform_5(%arg0: i32) -> (i32, i32) {
    %c0_i32 = arith.constant 0 : i32
    %c0_i32_0 = arith.constant 0 : i32
    %c0_i32_1 = arith.constant 0 : i32
    return %c0_i32, %c0_i32_0 : i32, i32
  }
  func.func @transform_6(%arg0: i32) -> (i32, i32) {
    %c0_i32 = arith.constant 0 : i32
    %c0_i32_0 = arith.constant 0 : i32
    %c0_i32_1 = arith.constant 0 : i32
    return %c0_i32, %c0_i32_0 : i32, i32
  }
  func.func @transform_7(%arg0: i32) -> (i32, i32, i32) {
    %c0_i32 = arith.constant 0 : i32
    %c0_i32_0 = arith.constant 0 : i32
    %c0_i32_1 = arith.constant 0 : i32
    return %arg0, %c0_i32, %c0_i32_0 : i32, i32, i32
  }
}

</mosaic_0001>

<llo_original>
// kernel: tpu_custom_call.1
$region0: #{tpu_custom_call.1}
  #allocation0 [shape = 'u32[]', space=smem, size = 0x4, offset = 0x4, fixed_abs, tag = 'smem constant byte address 0x4 - core index']
  #allocation1 [shape = 'u32[144,128]{1,0:T(1,128)}', space=vmem, size = 0x12000, scoped, tag = 'internal scratch']
  #allocation2 [shape = 'f32[1,1]{1,0:T(1,128)S(1)}', space=vmem, size = 0x200, scoped, tag = 'scoped memory for tpu_custom_call.1']
  %s0 = inlined_call_operand.hbm [shape: bf16[512,128], index: 0, kind: input, shape index: {}]
  %s1 = inlined_call_operand.hbm [shape: bf16[128,256], index: 1, kind: input, shape index: {}]
  %s2 = inlined_call_operand.vmem [shape: f32[1,256], index: 2, kind: input, shape index: {}]
  %s3 = inlined_call_operand.hbm [shape: bf16[256,256], index: 3, kind: input, shape index: {}]
  %s4 = inlined_call_operand.vmem [shape: f32[1,256], index: 4, kind: input, shape index: {}]
  %s5 = inlined_call_operand.vmem [shape: f32[1,256], index: 5, kind: input, shape index: {}]
  %s6 = inlined_call_operand.<no memory space> [shape: f32[1,1], index: 6, kind: input, shape index: {}]
  %s7 = inlined_call_operand.hbm [shape: f32[1,1,512], index: 7, kind: output, shape index: {}]
  %s8 = sld [smem:[#allocation0]]
  $region50: #{tpu_custom_call.1} parent=0
    _
  %s10 = ssub.s32 1, %s8
  %s11 = scalar_select 0, %s10, %s8
  %v12 = vstv %s6
  %13 = vst [vmem:[#allocation2] sm:$0x1] %v12
  $region1: #{tpu_custom_call.1} parent=0
    #allocation3 [shape = 'u8[131072]{0}', space=vmem, size = 0x20000, scoped, tag = 'input window, operand 0, single buffered']
    #allocation4 [shape = 's32[1]{0}', space=sflag, size = 0x4, scoped, tag = 'scoped memory for tpu_custom_call.1']
    #allocation5 [shape = 's32[1]{0}', space=sflag, size = 0x4, scoped, tag = 'scoped memory for tpu_custom_call.1']
    #allocation6 [shape = 'u8[65536]{0}', space=vmem, size = 0x10000, scoped, tag = 'input window, operand 1, single buffered']
    #allocation7 [shape = 's32[1]{0}', space=sflag, size = 0x4, scoped, tag = 'scoped memory for tpu_custom_call.1']
    #allocation8 [shape = 'u8[131072]{0}', space=vmem, size = 0x20000, scoped, tag = 'input window, operand 3, single buffered']
    #allocation9 [shape = 'u8[2048]{0}', space=vmem, size = 0x800, scoped, tag = 'output window, operand 0, single buffered']
    %14 = vsyncpa [#allocation4], 0
    %15 = vsyncpa [#allocation7], 0
    %16 = vsyncpa [#allocation5], 0
    // Predicated region
    $region2: #{tpu_custom_call.1} parent=1 // pred_check
      _
    $region3: #{tpu_custom_call.1} parent=1 // pred_check_branch
      %18 = sbr.rel (0) target = $region5
    $region4: #{tpu_custom_call.1} parent=1 // pred_region
      %s20 = ssub.s32 4096, 4096
      %21 = vsyncadd [#allocation4], %s20
      %s22 = sshll.u32 [#allocation3], 4
      %s23 = int_to_ptr.vmem [resolvable:$true] %s22
      %28 = dma.hbm_to_vmem [thread:$0]  %s0, 4096, %s23, [#allocation4], 64, 64, 4
    $region5: #{tpu_custom_call.1} parent=1 // pred_fallthru
      _
    // Predicated region
    $region6: #{tpu_custom_call.1} parent=1 // pred_check
      _
    $region7: #{tpu_custom_call.1} parent=1 // pred_check_branch
      %30 = sbr.rel (0) target = $region9
    $region8: #{tpu_custom_call.1} parent=1 // pred_region
      %s32 = ssub.s32 2048, 2048
      %33 = vsyncadd [#allocation7], %s32
      %s34 = sshll.u32 [#allocation6], 4
      %s35 = int_to_ptr.vmem [resolvable:$true] %s34
      %40 = dma.hbm_to_vmem [thread:$0]  %s1, 2048, %s35, [#allocation7], 128, 128, 8
    $region9: #{tpu_custom_call.1} parent=1 // pred_fallthru
      _
    // Predicated region
    $region10: #{tpu_custom_call.1} parent=1 // pred_check
      _
    $region11: #{tpu_custom_call.1} parent=1 // pred_check_branch
      %42 = sbr.rel (0) target = $region13
    $region12: #{tpu_custom_call.1} parent=1 // pred_region
      _
    $region13: #{tpu_custom_call.1} parent=1 // pred_fallthru
      _
    // Predicated region
    $region14: #{tpu_custom_call.1} parent=1 // pred_check
      _
    $region15: #{tpu_custom_call.1} parent=1 // pred_check_branch
      %44 = sbr.rel (0) target = $region17
    $region16: #{tpu_custom_call.1} parent=1 // pred_region
      %s46 = ssub.s32 4096, 4096
      %47 = vsyncadd [#allocation7], %s46
      %s48 = sshll.u32 [#allocation8], 4
      %s49 = int_to_ptr.vmem [resolvable:$true] %s48
      %54 = dma.hbm_to_vmem [thread:$0]  %s3, 4096, %s49, [#allocation7], 128, 128, 8
    $region17: #{tpu_custom_call.1} parent=1 // pred_fallthru
      _
    // Predicated region
    $region18: #{tpu_custom_call.1} parent=1 // pred_check
      _
    $region19: #{tpu_custom_call.1} parent=1 // pred_check_branch
      %56 = sbr.rel (0) target = $region21
    $region20: #{tpu_custom_call.1} parent=1 // pred_region
      _
    $region21: #{tpu_custom_call.1} parent=1 // pred_fallthru
      _
    // Predicated region
    $region22: #{tpu_custom_call.1} parent=1 // pred_check
      _
    $region23: #{tpu_custom_call.1} parent=1 // pred_check_branch
      %58 = sbr.rel (0) target = $region25
    $region24: #{tpu_custom_call.1} parent=1 // pred_region
      _
    $region25: #{tpu_custom_call.1} parent=1 // pred_fallthru
      _
    // Predicated region
    $region26: #{tpu_custom_call.1} parent=1 // pred_check
      _
    $region27: #{tpu_custom_call.1} parent=1 // pred_check_branch
      %60 = sbr.rel (0) target = $region29
    $region28: #{tpu_custom_call.1} parent=1 // pred_region
      _
    $region29: #{tpu_custom_call.1} parent=1 // pred_fallthru
      _
    // Predicated region
    $region30: #{tpu_custom_call.1} parent=1 // pred_check
      _
    $region31: #{tpu_custom_call.1} parent=1 // pred_check_branch
      %62 = sbr.rel (0) target = $region33
    $region32: #{tpu_custom_call.1} parent=1 // pred_region
      %63 = dma.done [#allocation4], 4096
    $region33: #{tpu_custom_call.1} parent=1 // pred_fallthru
      _
    // Predicated region
    $region34: #{tpu_custom_call.1} parent=1 // pred_check
      _
    $region35: #{tpu_custom_call.1} parent=1 // pred_check_branch
      %65 = sbr.rel (0) target = $region37
    $region36: #{tpu_custom_call.1} parent=1 // pred_region
      %66 = dma.done [#allocation7], 2048
    $region37: #{tpu_custom_call.1} parent=1 // pred_fallthru
      _
    // Predicated region
    $region38: #{tpu_custom_call.1} parent=1 // pred_check
      _
    $region39: #{tpu_custom_call.1} parent=1 // pred_check_branch
      %68 = sbr.rel (0) target = $region41
    $region40: #{tpu_custom_call.1} parent=1 // pred_region
      %69 = dma.done [#allocation7], 4096
    $region41: #{tpu_custom_call.1} parent=1 // pred_fallthru
      _
    %v71 = vld [vmem:[#allocation3] sm:$0xf]
    %v72 = vld [vmem:[#allocation3 + $0x4] sm:$0xf]
    %v73 = vld [vmem:[#allocation3 + $0x8] sm:$0xf]
    %v74 = vld [vmem:[#allocation3 + $0xc] sm:$0xf]
    %v75 = vld [vmem:[#allocation3 + $0x10] sm:$0xf]
    %v76 = vld [vmem:[#allocation3 + $0x14] sm:$0xf]
    %v77 = vld [vmem:[#allocation3 + $0x18] sm:$0xf]
    %v78 = vld [vmem:[#allocation3 + $0x1c] sm:$0xf]
    %v79 = vld [vmem:[#allocation3 + $0x20] sm:$0xf]
    %v80 = vld [vmem:[#allocation3 + $0x24] sm:$0xf]
    %v81 = vld [vmem:[#allocation3 + $0x28] sm:$0xf]
    %v82 = vld [vmem:[#allocation3 + $0x2c] sm:$0xf]
    %v83 = vld [vmem:[#allocation3 + $0x30] sm:$0xf]
    %v84 = vld [vmem:[#allocation3 + $0x34] sm:$0xf]
    %v85 = vld [vmem:[#allocation3 + $0x38] sm:$0xf]
    %v86 = vld [vmem:[#allocation3 + $0x3c] sm:$0xf]
    %v87 = vld [vmem:[#allocation3 + $0x40] sm:$0xf]
    %v88 = vld [vmem:[#allocation3 + $0x44] sm:$0xf]
    %v89 = vld [vmem:[#allocation3 + $0x48] sm:$0xf]
    %v90 = vld [vmem:[#allocation3 + $0x4c] sm:$0xf]
    %v91 = vld [vmem:[#allocation3 + $0x50] sm:$0xf]
    %v92 = vld [vmem:[#allocation3 + $0x54] sm:$0xf]
    %v93 = vld [vmem:[#allocation3 + $0x58] sm:$0xf]
    %v94 = vld [vmem:[#allocation3 + $0x5c] sm:$0xf]
    %v95 = vld [vmem:[#allocation3 + $0x60] sm:$0xf]
    %v96 = vld [vmem:[#allocation3 + $0x64] sm:$0xf]
    %v97 = vld [vmem:[#allocation3 + $0x68] sm:$0xf]
    %v98 = vld [vmem:[#allocation3 + $0x6c] sm:$0xf]
    %v99 = vld [vmem:[#allocation3 + $0x70] sm:$0xf]
    %v100 = vld [vmem:[#allocation3 + $0x74] sm:$0xf]
    %v101 = vld [vmem:[#allocation3 + $0x78] sm:$0xf]
    %v102 = vld [vmem:[#allocation3 + $0x7c] sm:$0xf]
    %v103 = vld [vmem:[#allocation3 + $0x80] sm:$0xf]
    %v104 = vld [vmem:[#allocation3 + $0x84] sm:$0xf]
    %v105 = vld [vmem:[#allocation3 + $0x88] sm:$0xf]
    %v106 = vld [vmem:[#allocation3 + $0x8c] sm:$0xf]
    %v107 = vld [vmem:[#allocation3 + $0x90] sm:$0xf]
    %v108 = vld [vmem:[#allocation3 + $0x94] sm:$0xf]
    %v109 = vld [vmem:[#allocation3 + $0x98] sm:$0xf]
    %v110 = vld [vmem:[#allocation3 + $0x9c] sm:$0xf]
    %v111 = vld [vmem:[#allocation3 + $0xa0] sm:$0xf]
    %v112 = vld [vmem:[#allocation3 + $0xa4] sm:$0xf]
    %v113 = vld [vmem:[#allocation3 + $0xa8] sm:$0xf]
    %v114 = vld [vmem:[#allocation3 + $0xac] sm:$0xf]
    %v115 = vld [vmem:[#allocation3 + $0xb0] sm:$0xf]
    %v116 = vld [vmem:[#allocation3 + $0xb4] sm:$0xf]
    %v117 = vld [vmem:[#allocation3 + $0xb8] sm:$0xf]
    %v118 = vld [vmem:[#allocation3 + $0xbc] sm:$0xf]
    %v119 = vld [vmem:[#allocation3 + $0xc0] sm:$0xf]
    %v120 = vld [vmem:[#allocation3 + $0xc4] sm:$0xf]
    %v121 = vld [vmem:[#allocation3 + $0xc8] sm:$0xf]
    %v122 = vld [vmem:[#allocation3 + $0xcc] sm:$0xf]
    %v123 = vld [vmem:[#allocation3 + $0xd0] sm:$0xf]
    %v124 = vld [vmem:[#allocation3 + $0xd4] sm:$0xf]
    %v125 = vld [vmem:[#allocation3 + $0xd8] sm:$0xf]
    %v126 = vld [vmem:[#allocation3 + $0xdc] sm:$0xf]
    %v127 = vld [vmem:[#allocation3 + $0xe0] sm:$0xf]
    %v128 = vld [vmem:[#allocation3 + $0xe4] sm:$0xf]
    %v129 = vld [vmem:[#allocation3 + $0xe8] sm:$0xf]
    %v130 = vld [vmem:[#allocation3 + $0xec] sm:$0xf]
    %v131 = vld [vmem:[#allocation3 + $0xf0] sm:$0xf]
    %v132 = vld [vmem:[#allocation3 + $0xf4] sm:$0xf]
    %v133 = vld [vmem:[#allocation3 + $0xf8] sm:$0xf]
    %v134 = vld [vmem:[#allocation3 + $0xfc] sm:$0xf]
    %v135 = vld [vmem:[#allocation6] sm:$0xff]
    %v136 = vld [vmem:[#allocation6 + $0x8] sm:$0xff]
    %v137 = vld [vmem:[#allocation6 + $0x10] sm:$0xff]
    %v138 = vld [vmem:[#allocation6 + $0x18] sm:$0xff]
    %v139 = vld [vmem:[#allocation6 + $0x20] sm:$0xff]
    %v140 = vld [vmem:[#allocation6 + $0x28] sm:$0xff]
    %v141 = vld [vmem:[#allocation6 + $0x30] sm:$0xff]
    %v142 = vld [vmem:[#allocation6 + $0x38] sm:$0xff]
    %v143 = vld [vmem:[#allocation6 + $0x40] sm:$0xff]
    %v144 = vld [vmem:[#allocation6 + $0x48] sm:$0xff]
    %v145 = vld [vmem:[#allocation6 + $0x50] sm:$0xff]
    %v146 = vld [vmem:[#allocation6 + $0x58] sm:$0xff]
    %v147 = vld [vmem:[#allocation6 + $0x60] sm:$0xff]
    %v148 = vld [vmem:[#allocation6 + $0x68] sm:$0xff]
    %v149 = vld [vmem:[#allocation6 + $0x70] sm:$0xff]
    %v150 = vld [vmem:[#allocation6 + $0x78] sm:$0xff]
    %v151 = vld [vmem:[%s2] sm:$0x3]
    %v153 = vlaneseq
    %v154 = vshrl.u32 %v153, 7
    %v155 = vsub.s32 0, %v154
    %v156 = vrot.slane %v151, %v155
    %v157 = vlaneseq
    %v158 = vshrl.u32 %v157, 7
    %v159 = vsub.s32 1, %v158
    %v160 = vrot.slane %v151, %v159
    %v227 = vunpack.c.l.b16 %v71
    %v228 = vunpack.c.l.b16 %v72
    %v229 = vunpack.c.l.b16 %v73
    %v230 = vunpack.c.l.b16 %v74
    %v231 = vunpack.c.l.b16 %v75
    %v232 = vunpack.c.l.b16 %v76
    %v233 = vunpack.c.l.b16 %v77
    %v234 = vunpack.c.l.b16 %v78
    %v235 = vunpack.c.l.b16 %v79
    %v236 = vunpack.c.l.b16 %v80
    %v237 = vunpack.c.l.b16 %v81
    %v238 = vunpack.c.l.b16 %v82
    %v239 = vunpack.c.l.b16 %v83
    %v240 = vunpack.c.l.b16 %v84
    %v241 = vunpack.c.l.b16 %v85
    %v242 = vunpack.c.l.b16 %v86
    %v243 = vunpack.c.l.b16 %v87
    %v244 = vunpack.c.l.b16 %v88
    %v245 = vunpack.c.l.b16 %v89
    %v246 = vunpack.c.l.b16 %v90
    %v247 = vunpack.c.l.b16 %v91
    %v248 = vunpack.c.l.b16 %v92
    %v249 = vunpack.c.l.b16 %v93
    %v250 = vunpack.c.l.b16 %v94
    %v251 = vunpack.c.l.b16 %v95
    %v252 = vunpack.c.l.b16 %v96
    %v253 = vunpack.c.l.b16 %v97
    %v254 = vunpack.c.l.b16 %v98
    %v255 = vunpack.c.l.b16 %v99
    %v256 = vunpack.c.l.b16 %v100
    %v257 = vunpack.c.l.b16 %v101
    %v258 = vunpack.c.l.b16 %v102
    %v259 = vunpack.c.l.b16 %v103
    %v260 = vunpack.c.l.b16 %v104
    %v261 = vunpack.c.l.b16 %v105
    %v262 = vunpack.c.l.b16 %v106
    %v263 = vunpack.c.l.b16 %v107
    %v264 = vunpack.c.l.b16 %v108
    %v265 = vunpack.c.l.b16 %v109
    %v266 = vunpack.c.l.b16 %v110
    %v267 = vunpack.c.l.b16 %v111
    %v268 = vunpack.c.l.b16 %v112
    %v269 = vunpack.c.l.b16 %v113
    %v270 = vunpack.c.l.b16 %v114
    %v271 = vunpack.c.l.b16 %v115
    %v272 = vunpack.c.l.b16 %v116
    %v273 = vunpack.c.l.b16 %v117
    %v274 = vunpack.c.l.b16 %v118
    %v275 = vunpack.c.l.b16 %v119
    %v276 = vunpack.c.l.b16 %v120
    %v277 = vunpack.c.l.b16 %v121
    %v278 = vunpack.c.l.b16 %v122
    %v279 = vunpack.c.l.b16 %v123
    %v280 = vunpack.c.l.b16 %v124
    %v281 = vunpack.c.l.b16 %v125
    %v282 = vunpack.c.l.b16 %v126
    %v283 = vunpack.c.l.b16 %v127
    %v284 = vunpack.c.l.b16 %v128
    %v285 = vunpack.c.l.b16 %v129
    %v286 = vunpack.c.l.b16 %v130
    %v287 = vunpack.c.l.b16 %v131
    %v288 = vunpack.c.l.b16 %v132
    %v289 = vunpack.c.l.b16 %v133
    %v290 = vunpack.c.l.b16 %v134
    %v291 = vpack.c.b16 %v228, %v227
    %v292 = vpack.c.b16 %v230, %v229
    %v293 = vpack.c.b16 %v232, %v231
    %v294 = vpack.c.b16 %v234, %v233
    %v295 = vpack.c.b16 %v236, %v235
    %v296 = vpack.c.b16 %v238, %v237
    %v297 = vpack.c.b16 %v240, %v239
    %v298 = vpack.c.b16 %v242, %v241
    %v299 = vpack.c.b16 %v244, %v243
    %v300 = vpack.c.b16 %v246, %v245
    %v301 = vpack.c.b16 %v248, %v247
    %v302 = vpack.c.b16 %v250, %v249
    %v303 = vpack.c.b16 %v252, %v251
    %v304 = vpack.c.b16 %v254, %v253
    %v305 = vpack.c.b16 %v256, %v255
    %v306 = vpack.c.b16 %v258, %v257
    %v307 = vpack.c.b16 %v260, %v259
    %v308 = vpack.c.b16 %v262, %v261
    %v309 = vpack.c.b16 %v264, %v263
    %v310 = vpack.c.b16 %v266, %v265
    %v311 = vpack.c.b16 %v268, %v267
    %v312 = vpack.c.b16 %v270, %v269
    %v313 = vpack.c.b16 %v272, %v271
    %v314 = vpack.c.b16 %v274, %v273
    %v315 = vpack.c.b16 %v276, %v275
    %v316 = vpack.c.b16 %v278, %v277
    %v317 = vpack.c.b16 %v280, %v279
    %v318 = vpack.c.b16 %v282, %v281
    %v319 = vpack.c.b16 %v284, %v283
    %v320 = vpack.c.b16 %v286, %v285
    %v321 = vpack.c.b16 %v288, %v287
    %v322 = vpack.c.b16 %v290, %v289
    %v371 = vunpack.c.l.b16 %v135
    %v372 = vunpack.c.h.b16 %v135
    %v373 = vunpack.c.l.b16 %v136
    %v374 = vunpack.c.h.b16 %v136
    %v375 = vunpack.c.l.b16 %v137
    %v376 = vunpack.c.h.b16 %v137
    %v377 = vunpack.c.l.b16 %v138
    %v378 = vunpack.c.h.b16 %v138
    %v379 = vunpack.c.l.b16 %v139
    %v380 = vunpack.c.h.b16 %v139
    %v381 = vunpack.c.l.b16 %v140
    %v382 = vunpack.c.h.b16 %v140
    %v383 = vunpack.c.l.b16 %v141
    %v384 = vunpack.c.h.b16 %v141
    %v385 = vunpack.c.l.b16 %v142
    %v386 = vunpack.c.h.b16 %v142
    %v387 = vunpack.c.l.b16 %v143
    %v388 = vunpack.c.h.b16 %v143
    %v389 = vunpack.c.l.b16 %v144
    %v390 = vunpack.c.h.b16 %v144
    %v391 = vunpack.c.l.b16 %v145
    %v392 = vunpack.c.h.b16 %v145
    %v393 = vunpack.c.l.b16 %v146
    %v394 = vunpack.c.h.b16 %v146
    %v395 = vunpack.c.l.b16 %v147
    %v396 = vunpack.c.h.b16 %v147
    %v397 = vunpack.c.l.b16 %v148
    %v398 = vunpack.c.h.b16 %v148
    %v399 = vunpack.c.l.b16 %v149
    %v400 = vunpack.c.h.b16 %v149
    %v401 = vunpack.c.l.b16 %v150
    %v402 = vunpack.c.h.b16 %v150
    %v403 = vpack.c.b16 %v373, %v371
    %v404 = vpack.c.b16 %v374, %v372
    %v405 = vpack.c.b16 %v377, %v375
    %v406 = vpack.c.b16 %v378, %v376
    %v407 = vpack.c.b16 %v381, %v379
    %v408 = vpack.c.b16 %v382, %v380
    %v409 = vpack.c.b16 %v385, %v383
    %v410 = vpack.c.b16 %v386, %v384
    %v411 = vpack.c.b16 %v389, %v387
    %v412 = vpack.c.b16 %v390, %v388
    %v413 = vpack.c.b16 %v393, %v391
    %v414 = vpack.c.b16 %v394, %v392
    %v415 = vpack.c.b16 %v397, %v395
    %v416 = vpack.c.b16 %v398, %v396
    %v417 = vpack.c.b16 %v401, %v399
    %v418 = vpack.c.b16 %v402, %v400
    %435 = vmatprep.subr.bf16.mxu0 %v418
    %436 = vmatpush1.bf16.msra.mxu0 %v417
    %437 = vmatprep.subr.bf16.mxu0 %v416
    %438 = vmatpush1.bf16.msra.mxu0 %v415
    %439 = vmatprep.subr.bf16.mxu0 %v414
    %440 = vmatpush1.bf16.msra.mxu0 %v413
    %441 = vmatprep.subr.bf16.mxu0 %v412
    %442 = vmatpush1.bf16.msra.mxu0 %v411
    %443 = vmatprep.subr.bf16.mxu0 %v410
    %444 = vmatpush1.bf16.msra.mxu0 %v409
    %445 = vmatprep.subr.bf16.mxu0 %v408
    %446 = vmatpush1.bf16.msra.mxu0 %v407
    %447 = vmatprep.subr.bf16.mxu0 %v406
    %448 = vmatpush1.bf16.msra.mxu0 %v405
    %449 = vmatprep.subr.bf16.mxu0 %v404
    %450 = vmatpush1.bf16.msra.mxu0 %v403
    %451 = vmatprep.subr.bf16.mxu0 0
    %452 = vmatpush2.bf16.msra.mxu0 0
    %453 = vmatprep.subr.bf16.mxu0 0
    %454 = vmatpush2.bf16.msra.mxu0 0
    %455 = vmatprep.subr.bf16.mxu0 0
    %456 = vmatpush2.bf16.msra.mxu0 0
    %457 = vmatprep.subr.bf16.mxu0 0
    %458 = vmatpush2.bf16.msra.mxu0 0
    %459 = vmatprep.subr.bf16.mxu0 0
    %460 = vmatpush2.bf16.msra.mxu0 0
    %461 = vmatprep.subr.bf16.mxu0 0
    %462 = vmatpush2.bf16.msra.mxu0 0
    %463 = vmatprep.subr.bf16.mxu0 0
    %464 = vmatpush2.bf16.msra.mxu0 0
    %465 = vmatprep.subr.bf16.mxu0 0
    %466 = vmatpush2.bf16.msra.mxu0 0
    %467 = vmatprep.mubr.bf16.mxu0 0
    %468 = vmatmul.mubr.bf16.gmra.mxu0 %v291
    %v469 = vpop.f32.mrf.mxu0
    %v470 = vadd.f32 %v156, %v469
    %v471 = vpop.f32.mrf.mxu0
    %v472 = vadd.f32 %v160, %v471
    %v473 = vpop.f32.mrf.mxu0
    %v474 = vadd.f32 %v156, %v473
    %v475 = vpop.f32.mrf.mxu0
    %v476 = vadd.f32 %v160, %v475
    %477 = vmatprep.mubr.bf16.mxu0 0
    %478 = vmatmul.mubr.bf16.gmra.mxu0 %v292
    %v479 = vpop.f32.mrf.mxu0
    %v480 = vadd.f32 %v156, %v479
    %v481 = vpop.f32.mrf.mxu0
    %v482 = vadd.f32 %v160, %v481
    %v483 = vpop.f32.mrf.mxu0
    %v484 = vadd.f32 %v156, %v483
    %v485 = vpop.f32.mrf.mxu0
    %v486 = vadd.f32 %v160, %v485
    %487 = vmatprep.mubr.bf16.mxu0 0
    %488 = vmatmul.mubr.bf16.gmra.mxu0 %v293
    %v489 = vpop.f32.mrf.mxu0
    %v490 = vadd.f32 %v156, %v489
    %v491 = vpop.f32.mrf.mxu0
    %v492 = vadd.f32 %v160, %v491
    %v493 = vpop.f32.mrf.mxu0
    %v494 = vadd.f32 %v156, %v493
    %v495 = vpop.f32.mrf.mxu0
    %v496 = vadd.f32 %v160, %v495
    %497 = vmatprep.mubr.bf16.mxu0 0
    %498 = vmatmul.mubr.bf16.gmra.mxu0 %v294
    %v499 = vpop.f32.mrf.mxu0
    %v500 = vadd.f32 %v156, %v499
    %v501 = vpop.f32.mrf.mxu0
    %v502 = vadd.f32 %v160, %v501
    %v503 = vpop.f32.mrf.mxu0
    %v504 = vadd.f32 %v156, %v503
    %v505 = vpop.f32.mrf.mxu0
    %v506 = vadd.f32 %v160, %v505
    %507 = vmatprep.mubr.bf16.mxu0 0
    %508 = vmatmul.mubr.bf16.gmra.mxu0 %v295
    %v509 = vpop.f32.mrf.mxu0
    %v510 = vadd.f32 %v156, %v509
    %v511 = vpop.f32.mrf.mxu0
    %v512 = vadd.f32 %v160, %v511
    %v513 = vpop.f32.mrf.mxu0
    %v514 = vadd.f32 %v156, %v513
    %v515 = vpop.f32.mrf.mxu0
    %v516 = vadd.f32 %v160, %v515
    %517 = vmatprep.mubr.bf16.mxu0 0
    %518 = vmatmul.mubr.bf16.gmra.mxu0 %v296
    %v519 = vpop.f32.mrf.mxu0
    %v520 = vadd.f32 %v156, %v519
    %v521 = vpop.f32.mrf.mxu0
    %v522 = vadd.f32 %v160, %v521
    %v523 = vpop.f32.mrf.mxu0
    %v524 = vadd.f32 %v156, %v523
    %v525 = vpop.f32.mrf.mxu0
    %v526 = vadd.f32 %v160, %v525
    %527 = vmatprep.mubr.bf16.mxu0 0
    %528 = vmatmul.mubr.bf16.gmra.mxu0 %v297
    %v529 = vpop.f32.mrf.mxu0
    %v530 = vadd.f32 %v156, %v529
    %v531 = vpop.f32.mrf.mxu0
    %v532 = vadd.f32 %v160, %v531
    %v533 = vpop.f32.mrf.mxu0
    %v534 = vadd.f32 %v156, %v533
    %v535 = vpop.f32.mrf.mxu0
    %v536 = vadd.f32 %v160, %v535
    %537 = vmatprep.mubr.bf16.mxu0 0
    %538 = vmatmul.mubr.bf16.gmra.mxu0 %v298
    %v539 = vpop.f32.mrf.mxu0
    %v540 = vadd.f32 %v156, %v539
    %v541 = vpop.f32.mrf.mxu0
    %v542 = vadd.f32 %v160, %v541
    %v543 = vpop.f32.mrf.mxu0
    %v544 = vadd.f32 %v156, %v543
    %v545 = vpop.f32.mrf.mxu0
    %v546 = vadd.f32 %v160, %v545
    %547 = vmatprep.mubr.bf16.mxu0 0
    %548 = vmatmul.mubr.bf16.gmra.mxu0 %v299
    %v549 = vpop.f32.mrf.mxu0
    %v550 = vadd.f32 %v156, %v549
    %v551 = vpop.f32.mrf.mxu0
    %v552 = vadd.f32 %v160, %v551
    %v553 = vpop.f32.mrf.mxu0
    %v554 = vadd.f32 %v156, %v553
    %v555 = vpop.f32.mrf.mxu0
    %v556 = vadd.f32 %v160, %v555
    %557 = vmatprep.mubr.bf16.mxu0 0
    %558 = vmatmul.mubr.bf16.gmra.mxu0 %v300
    %v559 = vpop.f32.mrf.mxu0
    %v560 = vadd.f32 %v156, %v559
    %v561 = vpop.f32.mrf.mxu0
    %v562 = vadd.f32 %v160, %v561
    %v563 = vpop.f32.mrf.mxu0
    %v564 = vadd.f32 %v156, %v563
    %v565 = vpop.f32.mrf.mxu0
    %v566 = vadd.f32 %v160, %v565
    %567 = vmatprep.mubr.bf16.mxu0 0
    %568 = vmatmul.mubr.bf16.gmra.mxu0 %v301
    %v569 = vpop.f32.mrf.mxu0
    %v570 = vadd.f32 %v156, %v569
    %v571 = vpop.f32.mrf.mxu0
    %v572 = vadd.f32 %v160, %v571
    %v573 = vpop.f32.mrf.mxu0
    %v574 = vadd.f32 %v156, %v573
    %v575 = vpop.f32.mrf.mxu0
    %v576 = vadd.f32 %v160, %v575
    %577 = vmatprep.mubr.bf16.mxu0 0
    %578 = vmatmul.mubr.bf16.gmra.mxu0 %v302
    %v579 = vpop.f32.mrf.mxu0
    %v580 = vadd.f32 %v156, %v579
    %v581 = vpop.f32.mrf.mxu0
    %v582 = vadd.f32 %v160, %v581
    %v583 = vpop.f32.mrf.mxu0
    %v584 = vadd.f32 %v156, %v583
    %v585 = vpop.f32.mrf.mxu0
    %v586 = vadd.f32 %v160, %v585
    %587 = vmatprep.mubr.bf16.mxu0 0
    %588 = vmatmul.mubr.bf16.gmra.mxu0 %v303
    %v589 = vpop.f32.mrf.mxu0
    %v590 = vadd.f32 %v156, %v589
    %v591 = vpop.f32.mrf.mxu0
    %v592 = vadd.f32 %v160, %v591
    %v593 = vpop.f32.mrf.mxu0
    %v594 = vadd.f32 %v156, %v593
    %v595 = vpop.f32.mrf.mxu0
    %v596 = vadd.f32 %v160, %v595
    %597 = vmatprep.mubr.bf16.mxu0 0
    %598 = vmatmul.mubr.bf16.gmra.mxu0 %v304
    %v599 = vpop.f32.mrf.mxu0
    %v600 = vadd.f32 %v156, %v599
    %v601 = vpop.f32.mrf.mxu0
    %v602 = vadd.f32 %v160, %v601
    %v603 = vpop.f32.mrf.mxu0
    %v604 = vadd.f32 %v156, %v603
    %v605 = vpop.f32.mrf.mxu0
    %v606 = vadd.f32 %v160, %v605
    %607 = vmatprep.mubr.bf16.mxu0 0
    %608 = vmatmul.mubr.bf16.gmra.mxu0 %v305
    %v609 = vpop.f32.mrf.mxu0
    %v610 = vadd.f32 %v156, %v609
    %v611 = vpop.f32.mrf.mxu0
    %v612 = vadd.f32 %v160, %v611
    %v613 = vpop.f32.mrf.mxu0
    %v614 = vadd.f32 %v156, %v613
    %v615 = vpop.f32.mrf.mxu0
    %v616 = vadd.f32 %v160, %v615
    %617 = vmatprep.mubr.bf16.mxu0 0
    %618 = vmatmul.mubr.bf16.gmra.mxu0 %v306
    %v619 = vpop.f32.mrf.mxu0
    %v620 = vadd.f32 %v156, %v619
    %v621 = vpop.f32.mrf.mxu0
    %v622 = vadd.f32 %v160, %v621
    %v623 = vpop.f32.mrf.mxu0
    %v624 = vadd.f32 %v156, %v623
    %v625 = vpop.f32.mrf.mxu0
    %v626 = vadd.f32 %v160, %v625
    %627 = vmatprep.mubr.bf16.mxu0 0
    %628 = vmatmul.mubr.bf16.gmra.mxu0 %v307
    %v629 = vpop.f32.mrf.mxu0
    %v630 = vadd.f32 %v156, %v629
    %v631 = vpop.f32.mrf.mxu0
    %v632 = vadd.f32 %v160, %v631
    %v633 = vpop.f32.mrf.mxu0
    %v634 = vadd.f32 %v156, %v633
    %v635 = vpop.f32.mrf.mxu0
    %v636 = vadd.f32 %v160, %v635
    %637 = vmatprep.mubr.bf16.mxu0 0
    %638 = vmatmul.mubr.bf16.gmra.mxu0 %v308
    %v639 = vpop.f32.mrf.mxu0
    %v640 = vadd.f32 %v156, %v639
    %v641 = vpop.f32.mrf.mxu0
    %v642 = vadd.f32 %v160, %v641
    %v643 = vpop.f32.mrf.mxu0
    %v644 = vadd.f32 %v156, %v643
    %v645 = vpop.f32.mrf.mxu0
    %v646 = vadd.f32 %v160, %v645
    %647 = vmatprep.mubr.bf16.mxu0 0
    %648 = vmatmul.mubr.bf16.gmra.mxu0 %v309
    %v649 = vpop.f32.mrf.mxu0
    %v650 = vadd.f32 %v156, %v649
    %v651 = vpop.f32.mrf.mxu0
    %v652 = vadd.f32 %v160, %v651
    %v653 = vpop.f32.mrf.mxu0
    %v654 = vadd.f32 %v156, %v653
    %v655 = vpop.f32.mrf.mxu0
    %v656 = vadd.f32 %v160, %v655
    %657 = vmatprep.mubr.bf16.mxu0 0
    %658 = vmatmul.mubr.bf16.gmra.mxu0 %v310
    %v659 = vpop.f32.mrf.mxu0
    %v660 = vadd.f32 %v156, %v659
    %v661 = vpop.f32.mrf.mxu0
    %v662 = vadd.f32 %v160, %v661
    %v663 = vpop.f32.mrf.mxu0
    %v664 = vadd.f32 %v156, %v663
    %v665 = vpop.f32.mrf.mxu0
    %v666 = vadd.f32 %v160, %v665
    %667 = vmatprep.mubr.bf16.mxu0 0
    %668 = vmatmul.mubr.bf16.gmra.mxu0 %v311
    %v669 = vpop.f32.mrf.mxu0
    %v670 = vadd.f32 %v156, %v669
    %v671 = vpop.f32.mrf.mxu0
    %v672 = vadd.f32 %v160, %v671
    %v673 = vpop.f32.mrf.mxu0
    %v674 = vadd.f32 %v156, %v673
    %v675 = vpop.f32.mrf.mxu0
    %v676 = vadd.f32 %v160, %v675
    %677 = vmatprep.mubr.bf16.mxu0 0
    %678 = vmatmul.mubr.bf16.gmra.mxu0 %v312
    %v679 = vpop.f32.mrf.mxu0
    %v680 = vadd.f32 %v156, %v679
    %v681 = vpop.f32.mrf.mxu0
    %v682 = vadd.f32 %v160, %v681
    %v683 = vpop.f32.mrf.mxu0
    %v684 = vadd.f32 %v156, %v683
    %v685 = vpop.f32.mrf.mxu0
    %v686 = vadd.f32 %v160, %v685
    %687 = vmatprep.mubr.bf16.mxu0 0
    %688 = vmatmul.mubr.bf16.gmra.mxu0 %v313
    %v689 = vpop.f32.mrf.mxu0
    %v690 = vadd.f32 %v156, %v689
    %v691 = vpop.f32.mrf.mxu0
    %v692 = vadd.f32 %v160, %v691
    %v693 = vpop.f32.mrf.mxu0
    %v694 = vadd.f32 %v156, %v693
    %v695 = vpop.f32.mrf.mxu0
    %v696 = vadd.f32 %v160, %v695
    %697 = vmatprep.mubr.bf16.mxu0 0
    %698 = vmatmul.mubr.bf16.gmra.mxu0 %v314
    %v699 = vpop.f32.mrf.mxu0
    %v700 = vadd.f32 %v156, %v699
    %v701 = vpop.f32.mrf.mxu0
    %v702 = vadd.f32 %v160, %v701
    %v703 = vpop.f32.mrf.mxu0
    %v704 = vadd.f32 %v156, %v703
    %v705 = vpop.f32.mrf.mxu0
    %v706 = vadd.f32 %v160, %v705
    %707 = vmatprep.mubr.bf16.mxu0 0
    %708 = vmatmul.mubr.bf16.gmra.mxu0 %v315
    %v709 = vpop.f32.mrf.mxu0
    %v710 = vadd.f32 %v156, %v709
    %v711 = vpop.f32.mrf.mxu0
    %v712 = vadd.f32 %v160, %v711
    %v713 = vpop.f32.mrf.mxu0
    %v714 = vadd.f32 %v156, %v713
    %v715 = vpop.f32.mrf.mxu0
    %v716 = vadd.f32 %v160, %v715
    %717 = vmatprep.mubr.bf16.mxu0 0
    %718 = vmatmul.mubr.bf16.gmra.mxu0 %v316
    %v719 = vpop.f32.mrf.mxu0
    %v720 = vadd.f32 %v156, %v719
    %v721 = vpop.f32.mrf.mxu0
    %v722 = vadd.f32 %v160, %v721
    %v723 = vpop.f32.mrf.mxu0
    %v724 = vadd.f32 %v156, %v723
    %v725 = vpop.f32.mrf.mxu0
    %v726 = vadd.f32 %v160, %v725
    %727 = vmatprep.mubr.bf16.mxu0 0
    %728 = vmatmul.mubr.bf16.gmra.mxu0 %v317
    %v729 = vpop.f32.mrf.mxu0
    %v730 = vadd.f32 %v156, %v729
    %v731 = vpop.f32.mrf.mxu0
    %v732 = vadd.f32 %v160, %v731
    %v733 = vpop.f32.mrf.mxu0
    %v734 = vadd.f32 %v156, %v733
    %v735 = vpop.f32.mrf.mxu0
    %v736 = vadd.f32 %v160, %v735
    %737 = vmatprep.mubr.bf16.mxu0 0
    %738 = vmatmul.mubr.bf16.gmra.mxu0 %v318
    %v739 = vpop.f32.mrf.mxu0
    %v740 = vadd.f32 %v156, %v739
    %v741 = vpop.f32.mrf.mxu0
    %v742 = vadd.f32 %v160, %v741
    %v743 = vpop.f32.mrf.mxu0
    %v744 = vadd.f32 %v156, %v743
    %v745 = vpop.f32.mrf.mxu0
    %v746 = vadd.f32 %v160, %v745
    %747 = vmatprep.mubr.bf16.mxu0 0
    %748 = vmatmul.mubr.bf16.gmra.mxu0 %v319
    %v749 = vpop.f32.mrf.mxu0
    %v750 = vadd.f32 %v156, %v749
    %v751 = vpop.f32.mrf.mxu0
    %v752 = vadd.f32 %v160, %v751
    %v753 = vpop.f32.mrf.mxu0
    %v754 = vadd.f32 %v156, %v753
    %v755 = vpop.f32.mrf.mxu0
    %v756 = vadd.f32 %v160, %v755
    %757 = vmatprep.mubr.bf16.mxu0 0
    %758 = vmatmul.mubr.bf16.gmra.mxu0 %v320
    %v759 = vpop.f32.mrf.mxu0
    %v760 = vadd.f32 %v156, %v759
    %v761 = vpop.f32.mrf.mxu0
    %v762 = vadd.f32 %v160, %v761
    %v763 = vpop.f32.mrf.mxu0
    %v764 = vadd.f32 %v156, %v763
    %v765 = vpop.f32.mrf.mxu0
    %v766 = vadd.f32 %v160, %v765
    %767 = vmatprep.mubr.bf16.mxu0 0
    %768 = vmatmul.mubr.bf16.gmra.mxu0 %v321
    %v769 = vpop.f32.mrf.mxu0
    %v770 = vadd.f32 %v156, %v769
    %v771 = vpop.f32.mrf.mxu0
    %v772 = vadd.f32 %v160, %v771
    %v773 = vpop.f32.mrf.mxu0
    %v774 = vadd.f32 %v156, %v773
    %v775 = vpop.f32.mrf.mxu0
    %v776 = vadd.f32 %v160, %v775
    %777 = vmatprep.mubr.bf16.mxu0 0
    %778 = vmatmul.mubr.bf16.gmra.mxu0 %v322
    %v779 = vpop.f32.mrf.mxu0
    %v780 = vadd.f32 %v156, %v779
    %v781 = vpop.f32.mrf.mxu0
    %v782 = vadd.f32 %v160, %v781
    %v783 = vpop.f32.mrf.mxu0
    %v784 = vadd.f32 %v156, %v783
    %v785 = vpop.f32.mrf.mxu0
    %v786 = vadd.f32 %v160, %v785
    %787 = vdwg.mxu0
    %v788 = vmax.f32 %v470, 0.0
    %v789 = vmax.f32 %v472, 0.0
    %v790 = vmax.f32 %v474, 0.0
    %v791 = vmax.f32 %v476, 0.0
    %v792 = vmax.f32 %v480, 0.0
    %v793 = vmax.f32 %v482, 0.0
    %v794 = vmax.f32 %v484, 0.0
    %v795 = vmax.f32 %v486, 0.0
    %v796 = vmax.f32 %v490, 0.0
    %v797 = vmax.f32 %v492, 0.0
    %v798 = vmax.f32 %v494, 0.0
    %v799 = vmax.f32 %v496, 0.0
    %v800 = vmax.f32 %v500, 0.0
    %v801 = vmax.f32 %v502, 0.0
    %v802 = vmax.f32 %v504, 0.0
    %v803 = vmax.f32 %v506, 0.0
    %v804 = vmax.f32 %v510, 0.0
    %v805 = vmax.f32 %v512, 0.0
    %v806 = vmax.f32 %v514, 0.0
    %v807 = vmax.f32 %v516, 0.0
    %v808 = vmax.f32 %v520, 0.0
    %v809 = vmax.f32 %v522, 0.0
    %v810 = vmax.f32 %v524, 0.0
    %v811 = vmax.f32 %v526, 0.0
    %v812 = vmax.f32 %v530, 0.0
    %v813 = vmax.f32 %v532, 0.0
    %v814 = vmax.f32 %v534, 0.0
    %v815 = vmax.f32 %v536, 0.0
    %v816 = vmax.f32 %v540, 0.0
    %v817 = vmax.f32 %v542, 0.0
    %v818 = vmax.f32 %v544, 0.0
    %v819 = vmax.f32 %v546, 0.0
    %v820 = vmax.f32 %v550, 0.0
    %v821 = vmax.f32 %v552, 0.0
    %v822 = vmax.f32 %v554, 0.0
    %v823 = vmax.f32 %v556, 0.0
    %v824 = vmax.f32 %v560, 0.0
    %v825 = vmax.f32 %v562, 0.0
    %v826 = vmax.f32 %v564, 0.0
    %v827 = vmax.f32 %v566, 0.0
    %v828 = vmax.f32 %v570, 0.0
    %v829 = vmax.f32 %v572, 0.0
    %v830 = vmax.f32 %v574, 0.0
    %v831 = vmax.f32 %v576, 0.0
    %v832 = vmax.f32 %v580, 0.0
    %v833 = vmax.f32 %v582, 0.0
    %v834 = vmax.f32 %v584, 0.0
    %v835 = vmax.f32 %v586, 0.0
    %v836 = vmax.f32 %v590, 0.0
    %v837 = vmax.f32 %v592, 0.0
    %v838 = vmax.f32 %v594, 0.0
    %v839 = vmax.f32 %v596, 0.0
    %v840 = vmax.f32 %v600, 0.0
    %v841 = vmax.f32 %v602, 0.0
    %v842 = vmax.f32 %v604, 0.0
    %v843 = vmax.f32 %v606, 0.0
    %v844 = vmax.f32 %v610, 0.0
    %v845 = vmax.f32 %v612, 0.0
    %v846 = vmax.f32 %v614, 0.0
    %v847 = vmax.f32 %v616, 0.0
    %v848 = vmax.f32 %v620, 0.0
    %v849 = vmax.f32 %v622, 0.0
    %v850 = vmax.f32 %v624, 0.0
    %v851 = vmax.f32 %v626, 0.0
    %v852 = vmax.f32 %v630, 0.0
    %v853 = vmax.f32 %v632, 0.0
    %v854 = vmax.f32 %v634, 0.0
    %v855 = vmax.f32 %v636, 0.0
    %v856 = vmax.f32 %v640, 0.0
    %v857 = vmax.f32 %v642, 0.0
    %v858 = vmax.f32 %v644, 0.0
    %v859 = vmax.f32 %v646, 0.0
    %v860 = vmax.f32 %v650, 0.0
    %v861 = vmax.f32 %v652, 0.0
    %v862 = vmax.f32 %v654, 0.0
    %v863 = vmax.f32 %v656, 0.0
    %v864 = vmax.f32 %v660, 0.0
    %v865 = vmax.f32 %v662, 0.0
    %v866 = vmax.f32 %v664, 0.0
    %v867 = vmax.f32 %v666, 0.0
    %v868 = vmax.f32 %v670, 0.0
    %v869 = vmax.f32 %v672, 0.0
    %v870 = vmax.f32 %v674, 0.0
    %v871 = vmax.f32 %v676, 0.0
    %v872 = vmax.f32 %v680, 0.0
    %v873 = vmax.f32 %v682, 0.0
    %v874 = vmax.f32 %v684, 0.0
    %v875 = vmax.f32 %v686, 0.0
    %v876 = vmax.f32 %v690, 0.0
    %v877 = vmax.f32 %v692, 0.0
    %v878 = vmax.f32 %v694, 0.0
    %v879 = vmax.f32 %v696, 0.0
    %v880 = vmax.f32 %v700, 0.0
    %v881 = vmax.f32 %v702, 0.0
    %v882 = vmax.f32 %v704, 0.0
    %v883 = vmax.f32 %v706, 0.0
    %v884 = vmax.f32 %v710, 0.0
    %v885 = vmax.f32 %v712, 0.0
    %v886 = vmax.f32 %v714, 0.0
    %v887 = vmax.f32 %v716, 0.0
    %v888 = vmax.f32 %v720, 0.0
    %v889 = vmax.f32 %v722, 0.0
    %v890 = vmax.f32 %v724, 0.0
    %v891 = vmax.f32 %v726, 0.0
    %v892 = vmax.f32 %v730, 0.0
    %v893 = vmax.f32 %v732, 0.0
    %v894 = vmax.f32 %v734, 0.0
    %v895 = vmax.f32 %v736, 0.0
    %v896 = vmax.f32 %v740, 0.0
    %v897 = vmax.f32 %v742, 0.0
    %v898 = vmax.f32 %v744, 0.0
    %v899 = vmax.f32 %v746, 0.0
    %v900 = vmax.f32 %v750, 0.0
    %v901 = vmax.f32 %v752, 0.0
    %v902 = vmax.f32 %v754, 0.0
    %v903 = vmax.f32 %v756, 0.0
    %v904 = vmax.f32 %v760, 0.0
    %v905 = vmax.f32 %v762, 0.0
    %v906 = vmax.f32 %v764, 0.0
    %v907 = vmax.f32 %v766, 0.0
    %v908 = vmax.f32 %v770, 0.0
    %v909 = vmax.f32 %v772, 0.0
    %v910 = vmax.f32 %v774, 0.0
    %v911 = vmax.f32 %v776, 0.0
    %v912 = vmax.f32 %v780, 0.0
    %v913 = vmax.f32 %v782, 0.0
    %v914 = vmax.f32 %v784, 0.0
    %v915 = vmax.f32 %v786, 0.0
    %v916 = vpack.c.bf16 %v790, %v788
    %v917 = vpack.c.bf16 %v791, %v789
    %v918 = vpack.c.bf16 %v794, %v792
    %v919 = vpack.c.bf16 %v795, %v793
    %v920 = vpack.c.bf16 %v798, %v796
    %v921 = vpack.c.bf16 %v799, %v797
    %v922 = vpack.c.bf16 %v802, %v800
    %v923 = vpack.c.bf16 %v803, %v801
    %v924 = vpack.c.bf16 %v806, %v804
    %v925 = vpack.c.bf16 %v807, %v805
    %v926 = vpack.c.bf16 %v810, %v808
    %v927 = vpack.c.bf16 %v811, %v809
    %v928 = vpack.c.bf16 %v814, %v812
    %v929 = vpack.c.bf16 %v815, %v813
    %v930 = vpack.c.bf16 %v818, %v816
    %v931 = vpack.c.bf16 %v819, %v817
    %v932 = vpack.c.bf16 %v822, %v820
    %v933 = vpack.c.bf16 %v823, %v821
    %v934 = vpack.c.bf16 %v826, %v824
    %v935 = vpack.c.bf16 %v827, %v825
    %v936 = vpack.c.bf16 %v830, %v828
    %v937 = vpack.c.bf16 %v831, %v829
    %v938 = vpack.c.bf16 %v834, %v832
    %v939 = vpack.c.bf16 %v835, %v833
    %v940 = vpack.c.bf16 %v838, %v836
    %v941 = vpack.c.bf16 %v839, %v837
    %v942 = vpack.c.bf16 %v842, %v840
    %v943 = vpack.c.bf16 %v843, %v841
    %v944 = vpack.c.bf16 %v846, %v844
    %v945 = vpack.c.bf16 %v847, %v845
    %v946 = vpack.c.bf16 %v850, %v848
    %v947 = vpack.c.bf16 %v851, %v849
    %v948 = vpack.c.bf16 %v854, %v852
    %v949 = vpack.c.bf16 %v855, %v853
    %v950 = vpack.c.bf16 %v858, %v856
    %v951 = vpack.c.bf16 %v859, %v857
    %v952 = vpack.c.bf16 %v862, %v860
    %v953 = vpack.c.bf16 %v863, %v861
    %v954 = vpack.c.bf16 %v866, %v864
    %v955 = vpack.c.bf16 %v867, %v865
    %v956 = vpack.c.bf16 %v870, %v868
    %v957 = vpack.c.bf16 %v871, %v869
    %v958 = vpack.c.bf16 %v874, %v872
    %v959 = vpack.c.bf16 %v875, %v873
    %v960 = vpack.c.bf16 %v878, %v876
    %v961 = vpack.c.bf16 %v879, %v877
    %v962 = vpack.c.bf16 %v882, %v880
    %v963 = vpack.c.bf16 %v883, %v881
    %v964 = vpack.c.bf16 %v886, %v884
    %v965 = vpack.c.bf16 %v887, %v885
    %v966 = vpack.c.bf16 %v890, %v888
    %v967 = vpack.c.bf16 %v891, %v889
    %v968 = vpack.c.bf16 %v894, %v892
    %v969 = vpack.c.bf16 %v895, %v893
    %v970 = vpack.c.bf16 %v898, %v896
    %v971 = vpack.c.bf16 %v899, %v897
    %v972 = vpack.c.bf16 %v902, %v900
    %v973 = vpack.c.bf16 %v903, %v901
    %v974 = vpack.c.bf16 %v906, %v904
    %v975 = vpack.c.bf16 %v907, %v905
    %v976 = vpack.c.bf16 %v910, %v908
    %v977 = vpack.c.bf16 %v911, %v909
    %v978 = vpack.c.bf16 %v914, %v912
    %v979 = vpack.c.bf16 %v915, %v913
    %v980 = vld [vmem:[#allocation8] sm:$0xff]
    %v981 = vld [vmem:[#allocation8 + $0x8] sm:$0xff]
    %v982 = vld [vmem:[#allocation8 + $0x10] sm:$0xff]
    %v983 = vld [vmem:[#allocation8 + $0x18] sm:$0xff]
    %v984 = vld [vmem:[#allocation8 + $0x20] sm:$0xff]
    %v985 = vld [vmem:[#allocation8 + $0x28] sm:$0xff]
    %v986 = vld [vmem:[#allocation8 + $0x30] sm:$0xff]
    %v987 = vld [vmem:[#allocation8 + $0x38] sm:$0xff]
    %v988 = vld [vmem:[#allocation8 + $0x40] sm:$0xff]
    %v989 = vld [vmem:[#allocation8 + $0x48] sm:$0xff]
    %v990 = vld [vmem:[#allocation8 + $0x50] sm:$0xff]
    %v991 = vld [vmem:[#allocation8 + $0x58] sm:$0xff]
    %v992 = vld [vmem:[#allocation8 + $0x60] sm:$0xff]
    %v993 = vld [vmem:[#allocation8 + $0x68] sm:$0xff]
    %v994 = vld [vmem:[#allocation8 + $0x70] sm:$0xff]
    %v995 = vld [vmem:[#allocation8 + $0x78] sm:$0xff]
    %v996 = vld [vmem:[#allocation8 + $0x80] sm:$0xff]
    %v997 = vld [vmem:[#allocation8 + $0x88] sm:$0xff]
    %v998 = vld [vmem:[#allocation8 + $0x90] sm:$0xff]
    %v999 = vld [vmem:[#allocation8 + $0x98] sm:$0xff]
    %v1000 = vld [vmem:[#allocation8 + $0xa0] sm:$0xff]
    %v1001 = vld [vmem:[#allocation8 + $0xa8] sm:$0xff]
    %v1002 = vld [vmem:[#allocation8 + $0xb0] sm:$0xff]
    %v1003 = vld [vmem:[#allocation8 + $0xb8] sm:$0xff]
    %v1004 = vld [vmem:[#allocation8 + $0xc0] sm:$0xff]
    %v1005 = vld [vmem:[#allocation8 + $0xc8] sm:$0xff]
    %v1006 = vld [vmem:[#allocation8 + $0xd0] sm:$0xff]
    %v1007 = vld [vmem:[#allocation8 + $0xd8] sm:$0xff]
    %v1008 = vld [vmem:[#allocation8 + $0xe0] sm:$0xff]
    %v1009 = vld [vmem:[#allocation8 + $0xe8] sm:$0xff]
    %v1010 = vld [vmem:[#allocation8 + $0xf0] sm:$0xff]
    %v1011 = vld [vmem:[#allocation8 + $0xf8] sm:$0xff]
    %v1012 = vld [vmem:[%s4] sm:$0x3]
    %v1014 = vlaneseq
    %v1015 = vshrl.u32 %v1014, 7
    %v1016 = vsub.s32 0, %v1015
    %v1017 = vrot.slane %v1012, %v1016
    %v1018 = vlaneseq
    %v1019 = vshrl.u32 %v1018, 7
    %v1020 = vsub.s32 1, %v1019
    %v1021 = vrot.slane %v1012, %v1020
    %v1056 = vunpack.c.l.b16 %v980
    %v1057 = vunpack.c.h.b16 %v980
    %v1058 = vunpack.c.l.b16 %v981
    %v1059 = vunpack.c.h.b16 %v981
    %v1060 = vunpack.c.l.b16 %v982
    %v1061 = vunpack.c.h.b16 %v982
    %v1062 = vunpack.c.l.b16 %v983
    %v1063 = vunpack.c.h.b16 %v983
    %v1064 = vunpack.c.l.b16 %v984
    %v1065 = vunpack.c.h.b16 %v984
    %v1066 = vunpack.c.l.b16 %v985
    %v1067 = vunpack.c.h.b16 %v985
    %v1068 = vunpack.c.l.b16 %v986
    %v1069 = vunpack.c.h.b16 %v986
    %v1070 = vunpack.c.l.b16 %v987
    %v1071 = vunpack.c.h.b16 %v987
    %v1072 = vunpack.c.l.b16 %v988
    %v1073 = vunpack.c.h.b16 %v988
    %v1074 = vunpack.c.l.b16 %v989
    %v1075 = vunpack.c.h.b16 %v989
    %v1076 = vunpack.c.l.b16 %v990
    %v1077 = vunpack.c.h.b16 %v990
    %v1078 = vunpack.c.l.b16 %v991
    %v1079 = vunpack.c.h.b16 %v991
    %v1080 = vunpack.c.l.b16 %v992
    %v1081 = vunpack.c.h.b16 %v992
    %v1082 = vunpack.c.l.b16 %v993
    %v1083 = vunpack.c.h.b16 %v993
    %v1084 = vunpack.c.l.b16 %v994
    %v1085 = vunpack.c.h.b16 %v994
    %v1086 = vunpack.c.l.b16 %v995
    %v1087 = vunpack.c.h.b16 %v995
    %v1088 = vunpack.c.l.b16 %v996
    %v1089 = vunpack.c.h.b16 %v996
    %v1090 = vunpack.c.l.b16 %v997
    %v1091 = vunpack.c.h.b16 %v997
    %v1092 = vunpack.c.l.b16 %v998
    %v1093 = vunpack.c.h.b16 %v998
    %v1094 = vunpack.c.l.b16 %v999
    %v1095 = vunpack.c.h.b16 %v999
    %v1096 = vunpack.c.l.b16 %v1000
    %v1097 = vunpack.c.h.b16 %v1000
    %v1098 = vunpack.c.l.b16 %v1001
    %v1099 = vunpack.c.h.b16 %v1001
    %v1100 = vunpack.c.l.b16 %v1002
    %v1101 = vunpack.c.h.b16 %v1002
    %v1102 = vunpack.c.l.b16 %v1003
    %v1103 = vunpack.c.h.b16 %v1003
    %v1104 = vunpack.c.l.b16 %v1004
    %v1105 = vunpack.c.h.b16 %v1004
    %v1106 = vunpack.c.l.b16 %v1005
    %v1107 = vunpack.c.h.b16 %v1005
    %v1108 = vunpack.c.l.b16 %v1006
    %v1109 = vunpack.c.h.b16 %v1006
    %v1110 = vunpack.c.l.b16 %v1007
    %v1111 = vunpack.c.h.b16 %v1007
    %v1112 = vunpack.c.l.b16 %v1008
    %v1113 = vunpack.c.h.b16 %v1008
    %v1114 = vunpack.c.l.b16 %v1009
    %v1115 = vunpack.c.h.b16 %v1009
    %v1116 = vunpack.c.l.b16 %v1010
    %v1117 = vunpack.c.h.b16 %v1010
    %v1118 = vunpack.c.l.b16 %v1011
    %v1119 = vunpack.c.h.b16 %v1011
    %v1120 = vpack.c.b16 %v1058, %v1056
    %v1121 = vpack.c.b16 %v1059, %v1057
    %v1122 = vpack.c.b16 %v1062, %v1060
    %v1123 = vpack.c.b16 %v1063, %v1061
    %v1124 = vpack.c.b16 %v1066, %v1064
    %v1125 = vpack.c.b16 %v1067, %v1065
    %v1126 = vpack.c.b16 %v1070, %v1068
    %v1127 = vpack.c.b16 %v1071, %v1069
    %v1128 = vpack.c.b16 %v1074, %v1072
    %v1129 = vpack.c.b16 %v1075, %v1073
    %v1130 = vpack.c.b16 %v1078, %v1076
    %v1131 = vpack.c.b16 %v1079, %v1077
    %v1132 = vpack.c.b16 %v1082, %v1080
    %v1133 = vpack.c.b16 %v1083, %v1081
    %v1134 = vpack.c.b16 %v1086, %v1084
    %v1135 = vpack.c.b16 %v1087, %v1085
    %v1136 = vpack.c.b16 %v1090, %v1088
    %v1137 = vpack.c.b16 %v1091, %v1089
    %v1138 = vpack.c.b16 %v1094, %v1092
    %v1139 = vpack.c.b16 %v1095, %v1093
    %v1140 = vpack.c.b16 %v1098, %v1096
    %v1141 = vpack.c.b16 %v1099, %v1097
    %v1142 = vpack.c.b16 %v1102, %v1100
    %v1143 = vpack.c.b16 %v1103, %v1101
    %v1144 = vpack.c.b16 %v1106, %v1104
    %v1145 = vpack.c.b16 %v1107, %v1105
    %v1146 = vpack.c.b16 %v1110, %v1108
    %v1147 = vpack.c.b16 %v1111, %v1109
    %v1148 = vpack.c.b16 %v1114, %v1112
    %v1149 = vpack.c.b16 %v1115, %v1113
    %v1150 = vpack.c.b16 %v1118, %v1116
    %v1151 = vpack.c.b16 %v1119, %v1117
    %1184 = vmatprep.subr.bf16.mxu0 %v1135
    %1185 = vmatpush1.bf16.msra.mxu0 %v1134
    %1186 = vmatprep.subr.bf16.mxu0 %v1133
    %1187 = vmatpush1.bf16.msra.mxu0 %v1132
    %1188 = vmatprep.subr.bf16.mxu0 %v1131
    %1189 = vmatpush1.bf16.msra.mxu0 %v1130
    %1190 = vmatprep.subr.bf16.mxu0 %v1129
    %1191 = vmatpush1.bf16.msra.mxu0 %v1128
    %1192 = vmatprep.subr.bf16.mxu0 %v1127
    %1193 = vmatpush1.bf16.msra.mxu0 %v1126
    %1194 = vmatprep.subr.bf16.mxu0 %v1125
    %1195 = vmatpush1.bf16.msra.mxu0 %v1124
    %1196 = vmatprep.subr.bf16.mxu0 %v1123
    %1197 = vmatpush1.bf16.msra.mxu0 %v1122
    %1198 = vmatprep.subr.bf16.mxu0 %v1121
    %1199 = vmatpush1.bf16.msra.mxu0 %v1120
    %1200 = vmatprep.subr.bf16.mxu0 %v1151
    %1201 = vmatpush2.bf16.msra.mxu0 %v1150
    %1202 = vmatprep.subr.bf16.mxu0 %v1149
    %1203 = vmatpush2.bf16.msra.mxu0 %v1148
    %1204 = vmatprep.subr.bf16.mxu0 %v1147
    %1205 = vmatpush2.bf16.msra.mxu0 %v1146
    %1206 = vmatprep.subr.bf16.mxu0 %v1145
    %1207 = vmatpush2.bf16.msra.mxu0 %v1144
    %1208 = vmatprep.subr.bf16.mxu0 %v1143
    %1209 = vmatpush2.bf16.msra.mxu0 %v1142
    %1210 = vmatprep.subr.bf16.mxu0 %v1141
    %1211 = vmatpush2.bf16.msra.mxu0 %v1140
    %1212 = vmatprep.subr.bf16.mxu0 %v1139
    %1213 = vmatpush2.bf16.msra.mxu0 %v1138
    %1214 = vmatprep.subr.bf16.mxu0 %v1137
    %1215 = vmatpush2.bf16.msra.mxu0 %v1136
    %1216 = vmatprep.mubr.bf16.mxu0 %v917
    %1217 = vmatmul.mubr.bf16.gmra.mxu0 %v916
    %v1218 = vpop.f32.mrf.mxu0
    %v1219 = vadd.f32 %v1017, %v1218
    %v1220 = vpop.f32.mrf.mxu0
    %v1221 = vadd.f32 %v1021, %v1220
    %v1222 = vpop.f32.mrf.mxu0
    %v1223 = vadd.f32 %v1017, %v1222
    %v1224 = vpop.f32.mrf.mxu0
    %v1225 = vadd.f32 %v1021, %v1224
    %1226 = vmatprep.mubr.bf16.mxu0 %v919
    %1227 = vmatmul.mubr.bf16.gmra.mxu0 %v918
    %v1228 = vpop.f32.mrf.mxu0
    %v1229 = vadd.f32 %v1017, %v1228
    %v1230 = vpop.f32.mrf.mxu0
    %v1231 = vadd.f32 %v1021, %v1230
    %v1232 = vpop.f32.mrf.mxu0
    %v1233 = vadd.f32 %v1017, %v1232
    %v1234 = vpop.f32.mrf.mxu0
    %v1235 = vadd.f32 %v1021, %v1234
    %1236 = vmatprep.mubr.bf16.mxu0 %v921
    %1237 = vmatmul.mubr.bf16.gmra.mxu0 %v920
    %v1238 = vpop.f32.mrf.mxu0
    %v1239 = vadd.f32 %v1017, %v1238
    %v1240 = vpop.f32.mrf.mxu0
    %v1241 = vadd.f32 %v1021, %v1240
    %v1242 = vpop.f32.mrf.mxu0
    %v1243 = vadd.f32 %v1017, %v1242
    %v1244 = vpop.f32.mrf.mxu0
    %v1245 = vadd.f32 %v1021, %v1244
    %1246 = vmatprep.mubr.bf16.mxu0 %v923
    %1247 = vmatmul.mubr.bf16.gmra.mxu0 %v922
    %v1248 = vpop.f32.mrf.mxu0
    %v1249 = vadd.f32 %v1017, %v1248
    %v1250 = vpop.f32.mrf.mxu0
    %v1251 = vadd.f32 %v1021, %v1250
    %v1252 = vpop.f32.mrf.mxu0
    %v1253 = vadd.f32 %v1017, %v1252
    %v1254 = vpop.f32.mrf.mxu0
    %v1255 = vadd.f32 %v1021, %v1254
    %1256 = vmatprep.mubr.bf16.mxu0 %v925
    %1257 = vmatmul.mubr.bf16.gmra.mxu0 %v924
    %v1258 = vpop.f32.mrf.mxu0
    %v1259 = vadd.f32 %v1017, %v1258
    %v1260 = vpop.f32.mrf.mxu0
    %v1261 = vadd.f32 %v1021, %v1260
    %v1262 = vpop.f32.mrf.mxu0
    %v1263 = vadd.f32 %v1017, %v1262
    %v1264 = vpop.f32.mrf.mxu0
    %v1265 = vadd.f32 %v1021, %v1264
    %1266 = vmatprep.mubr.bf16.mxu0 %v927
    %1267 = vmatmul.mubr.bf16.gmra.mxu0 %v926
    %v1268 = vpop.f32.mrf.mxu0
    %v1269 = vadd.f32 %v1017, %v1268
    %v1270 = vpop.f32.mrf.mxu0
    %v1271 = vadd.f32 %v1021, %v1270
    %v1272 = vpop.f32.mrf.mxu0
    %v1273 = vadd.f32 %v1017, %v1272
    %v1274 = vpop.f32.mrf.mxu0
    %v1275 = vadd.f32 %v1021, %v1274
    %1276 = vmatprep.mubr.bf16.mxu0 %v929
    %1277 = vmatmul.mubr.bf16.gmra.mxu0 %v928
    %v1278 = vpop.f32.mrf.mxu0
    %v1279 = vadd.f32 %v1017, %v1278
    %v1280 = vpop.f32.mrf.mxu0
    %v1281 = vadd.f32 %v1021, %v1280
    %v1282 = vpop.f32.mrf.mxu0
    %v1283 = vadd.f32 %v1017, %v1282
    %v1284 = vpop.f32.mrf.mxu0
    %v1285 = vadd.f32 %v1021, %v1284
    %1286 = vmatprep.mubr.bf16.mxu0 %v931
    %1287 = vmatmul.mubr.bf16.gmra.mxu0 %v930
    %v1288 = vpop.f32.mrf.mxu0
    %v1289 = vadd.f32 %v1017, %v1288
    %v1290 = vpop.f32.mrf.mxu0
    %v1291 = vadd.f32 %v1021, %v1290
    %v1292 = vpop.f32.mrf.mxu0
    %v1293 = vadd.f32 %v1017, %v1292
    %v1294 = vpop.f32.mrf.mxu0
    %v1295 = vadd.f32 %v1021, %v1294
    %1296 = vmatprep.mubr.bf16.mxu0 %v933
    %1297 = vmatmul.mubr.bf16.gmra.mxu0 %v932
    %v1298 = vpop.f32.mrf.mxu0
    %v1299 = vadd.f32 %v1017, %v1298
    %v1300 = vpop.f32.mrf.mxu0
    %v1301 = vadd.f32 %v1021, %v1300
    %v1302 = vpop.f32.mrf.mxu0
    %v1303 = vadd.f32 %v1017, %v1302
    %v1304 = vpop.f32.mrf.mxu0
    %v1305 = vadd.f32 %v1021, %v1304
    %1306 = vmatprep.mubr.bf16.mxu0 %v935
    %1307 = vmatmul.mubr.bf16.gmra.mxu0 %v934
    %v1308 = vpop.f32.mrf.mxu0
    %v1309 = vadd.f32 %v1017, %v1308
    %v1310 = vpop.f32.mrf.mxu0
    %v1311 = vadd.f32 %v1021, %v1310
    %v1312 = vpop.f32.mrf.mxu0
    %v1313 = vadd.f32 %v1017, %v1312
    %v1314 = vpop.f32.mrf.mxu0
    %v1315 = vadd.f32 %v1021, %v1314
    %1316 = vmatprep.mubr.bf16.mxu0 %v937
    %1317 = vmatmul.mubr.bf16.gmra.mxu0 %v936
    %v1318 = vpop.f32.mrf.mxu0
    %v1319 = vadd.f32 %v1017, %v1318
    %v1320 = vpop.f32.mrf.mxu0
    %v1321 = vadd.f32 %v1021, %v1320
    %v1322 = vpop.f32.mrf.mxu0
    %v1323 = vadd.f32 %v1017, %v1322
    %v1324 = vpop.f32.mrf.mxu0
    %v1325 = vadd.f32 %v1021, %v1324
    %1326 = vmatprep.mubr.bf16.mxu0 %v939
    %1327 = vmatmul.mubr.bf16.gmra.mxu0 %v938
    %v1328 = vpop.f32.mrf.mxu0
    %v1329 = vadd.f32 %v1017, %v1328
    %v1330 = vpop.f32.mrf.mxu0
    %v1331 = vadd.f32 %v1021, %v1330
    %v1332 = vpop.f32.mrf.mxu0
    %v1333 = vadd.f32 %v1017, %v1332
    %v1334 = vpop.f32.mrf.mxu0
    %v1335 = vadd.f32 %v1021, %v1334
    %1336 = vmatprep.mubr.bf16.mxu0 %v941
    %1337 = vmatmul.mubr.bf16.gmra.mxu0 %v940
    %v1338 = vpop.f32.mrf.mxu0
    %v1339 = vadd.f32 %v1017, %v1338
    %v1340 = vpop.f32.mrf.mxu0
    %v1341 = vadd.f32 %v1021, %v1340
    %v1342 = vpop.f32.mrf.mxu0
    %v1343 = vadd.f32 %v1017, %v1342
    %v1344 = vpop.f32.mrf.mxu0
    %v1345 = vadd.f32 %v1021, %v1344
    %1346 = vmatprep.mubr.bf16.mxu0 %v943
    %1347 = vmatmul.mubr.bf16.gmra.mxu0 %v942
    %v1348 = vpop.f32.mrf.mxu0
    %v1349 = vadd.f32 %v1017, %v1348
    %v1350 = vpop.f32.mrf.mxu0
    %v1351 = vadd.f32 %v1021, %v1350
    %v1352 = vpop.f32.mrf.mxu0
    %v1353 = vadd.f32 %v1017, %v1352
    %v1354 = vpop.f32.mrf.mxu0
    %v1355 = vadd.f32 %v1021, %v1354
    %1356 = vmatprep.mubr.bf16.mxu0 %v945
    %1357 = vmatmul.mubr.bf16.gmra.mxu0 %v944
    %v1358 = vpop.f32.mrf.mxu0
    %v1359 = vadd.f32 %v1017, %v1358
    %v1360 = vpop.f32.mrf.mxu0
    %v1361 = vadd.f32 %v1021, %v1360
    %v1362 = vpop.f32.mrf.mxu0
    %v1363 = vadd.f32 %v1017, %v1362
    %v1364 = vpop.f32.mrf.mxu0
    %v1365 = vadd.f32 %v1021, %v1364
    %1366 = vmatprep.mubr.bf16.mxu0 %v947
    %1367 = vmatmul.mubr.bf16.gmra.mxu0 %v946
    %v1368 = vpop.f32.mrf.mxu0
    %v1369 = vadd.f32 %v1017, %v1368
    %v1370 = vpop.f32.mrf.mxu0
    %v1371 = vadd.f32 %v1021, %v1370
    %v1372 = vpop.f32.mrf.mxu0
    %v1373 = vadd.f32 %v1017, %v1372
    %v1374 = vpop.f32.mrf.mxu0
    %v1375 = vadd.f32 %v1021, %v1374
    %1376 = vmatprep.mubr.bf16.mxu0 %v949
    %1377 = vmatmul.mubr.bf16.gmra.mxu0 %v948
    %v1378 = vpop.f32.mrf.mxu0
    %v1379 = vadd.f32 %v1017, %v1378
    %v1380 = vpop.f32.mrf.mxu0
    %v1381 = vadd.f32 %v1021, %v1380
    %v1382 = vpop.f32.mrf.mxu0
    %v1383 = vadd.f32 %v1017, %v1382
    %v1384 = vpop.f32.mrf.mxu0
    %v1385 = vadd.f32 %v1021, %v1384
    %1386 = vmatprep.mubr.bf16.mxu0 %v951
    %1387 = vmatmul.mubr.bf16.gmra.mxu0 %v950
    %v1388 = vpop.f32.mrf.mxu0
    %v1389 = vadd.f32 %v1017, %v1388
    %v1390 = vpop.f32.mrf.mxu0
    %v1391 = vadd.f32 %v1021, %v1390
    %v1392 = vpop.f32.mrf.mxu0
    %v1393 = vadd.f32 %v1017, %v1392
    %v1394 = vpop.f32.mrf.mxu0
    %v1395 = vadd.f32 %v1021, %v1394
    %1396 = vmatprep.mubr.bf16.mxu0 %v953
    %1397 = vmatmul.mubr.bf16.gmra.mxu0 %v952
    %v1398 = vpop.f32.mrf.mxu0
    %v1399 = vadd.f32 %v1017, %v1398
    %v1400 = vpop.f32.mrf.mxu0
    %v1401 = vadd.f32 %v1021, %v1400
    %v1402 = vpop.f32.mrf.mxu0
    %v1403 = vadd.f32 %v1017, %v1402
    %v1404 = vpop.f32.mrf.mxu0
    %v1405 = vadd.f32 %v1021, %v1404
    %1406 = vmatprep.mubr.bf16.mxu0 %v955
    %1407 = vmatmul.mubr.bf16.gmra.mxu0 %v954
    %v1408 = vpop.f32.mrf.mxu0
    %v1409 = vadd.f32 %v1017, %v1408
    %v1410 = vpop.f32.mrf.mxu0
    %v1411 = vadd.f32 %v1021, %v1410
    %v1412 = vpop.f32.mrf.mxu0
    %v1413 = vadd.f32 %v1017, %v1412
    %v1414 = vpop.f32.mrf.mxu0
    %v1415 = vadd.f32 %v1021, %v1414
    %1416 = vmatprep.mubr.bf16.mxu0 %v957
    %1417 = vmatmul.mubr.bf16.gmra.mxu0 %v956
    %v1418 = vpop.f32.mrf.mxu0
    %v1419 = vadd.f32 %v1017, %v1418
    %v1420 = vpop.f32.mrf.mxu0
    %v1421 = vadd.f32 %v1021, %v1420
    %v1422 = vpop.f32.mrf.mxu0
    %v1423 = vadd.f32 %v1017, %v1422
    %v1424 = vpop.f32.mrf.mxu0
    %v1425 = vadd.f32 %v1021, %v1424
    %1426 = vmatprep.mubr.bf16.mxu0 %v959
    %1427 = vmatmul.mubr.bf16.gmra.mxu0 %v958
    %v1428 = vpop.f32.mrf.mxu0
    %v1429 = vadd.f32 %v1017, %v1428
    %v1430 = vpop.f32.mrf.mxu0
    %v1431 = vadd.f32 %v1021, %v1430
    %v1432 = vpop.f32.mrf.mxu0
    %v1433 = vadd.f32 %v1017, %v1432
    %v1434 = vpop.f32.mrf.mxu0
    %v1435 = vadd.f32 %v1021, %v1434
    %1436 = vmatprep.mubr.bf16.mxu0 %v961
    %1437 = vmatmul.mubr.bf16.gmra.mxu0 %v960
    %v1438 = vpop.f32.mrf.mxu0
    %v1439 = vadd.f32 %v1017, %v1438
    %v1440 = vpop.f32.mrf.mxu0
    %v1441 = vadd.f32 %v1021, %v1440
    %v1442 = vpop.f32.mrf.mxu0
    %v1443 = vadd.f32 %v1017, %v1442
    %v1444 = vpop.f32.mrf.mxu0
    %v1445 = vadd.f32 %v1021, %v1444
    %1446 = vmatprep.mubr.bf16.mxu0 %v963
    %1447 = vmatmul.mubr.bf16.gmra.mxu0 %v962
    %v1448 = vpop.f32.mrf.mxu0
    %v1449 = vadd.f32 %v1017, %v1448
    %v1450 = vpop.f32.mrf.mxu0
    %v1451 = vadd.f32 %v1021, %v1450
    %v1452 = vpop.f32.mrf.mxu0
    %v1453 = vadd.f32 %v1017, %v1452
    %v1454 = vpop.f32.mrf.mxu0
    %v1455 = vadd.f32 %v1021, %v1454
    %1456 = vmatprep.mubr.bf16.mxu0 %v965
    %1457 = vmatmul.mubr.bf16.gmra.mxu0 %v964
    %v1458 = vpop.f32.mrf.mxu0
    %v1459 = vadd.f32 %v1017, %v1458
    %v1460 = vpop.f32.mrf.mxu0
    %v1461 = vadd.f32 %v1021, %v1460
    %v1462 = vpop.f32.mrf.mxu0
    %v1463 = vadd.f32 %v1017, %v1462
    %v1464 = vpop.f32.mrf.mxu0
    %v1465 = vadd.f32 %v1021, %v1464
    %1466 = vmatprep.mubr.bf16.mxu0 %v967
    %1467 = vmatmul.mubr.bf16.gmra.mxu0 %v966
    %v1468 = vpop.f32.mrf.mxu0
    %v1469 = vadd.f32 %v1017, %v1468
    %v1470 = vpop.f32.mrf.mxu0
    %v1471 = vadd.f32 %v1021, %v1470
    %v1472 = vpop.f32.mrf.mxu0
    %v1473 = vadd.f32 %v1017, %v1472
    %v1474 = vpop.f32.mrf.mxu0
    %v1475 = vadd.f32 %v1021, %v1474
    %1476 = vmatprep.mubr.bf16.mxu0 %v969
    %1477 = vmatmul.mubr.bf16.gmra.mxu0 %v968
    %v1478 = vpop.f32.mrf.mxu0
    %v1479 = vadd.f32 %v1017, %v1478
    %v1480 = vpop.f32.mrf.mxu0
    %v1481 = vadd.f32 %v1021, %v1480
    %v1482 = vpop.f32.mrf.mxu0
    %v1483 = vadd.f32 %v1017, %v1482
    %v1484 = vpop.f32.mrf.mxu0
    %v1485 = vadd.f32 %v1021, %v1484
    %1486 = vmatprep.mubr.bf16.mxu0 %v971
    %1487 = vmatmul.mubr.bf16.gmra.mxu0 %v970
    %v1488 = vpop.f32.mrf.mxu0
    %v1489 = vadd.f32 %v1017, %v1488
    %v1490 = vpop.f32.mrf.mxu0
    %v1491 = vadd.f32 %v1021, %v1490
    %v1492 = vpop.f32.mrf.mxu0
    %v1493 = vadd.f32 %v1017, %v1492
    %v1494 = vpop.f32.mrf.mxu0
    %v1495 = vadd.f32 %v1021, %v1494
    %1496 = vmatprep.mubr.bf16.mxu0 %v973
    %1497 = vmatmul.mubr.bf16.gmra.mxu0 %v972
    %v1498 = vpop.f32.mrf.mxu0
    %v1499 = vadd.f32 %v1017, %v1498
    %v1500 = vpop.f32.mrf.mxu0
    %v1501 = vadd.f32 %v1021, %v1500
    %v1502 = vpop.f32.mrf.mxu0
    %v1503 = vadd.f32 %v1017, %v1502
    %v1504 = vpop.f32.mrf.mxu0
    %v1505 = vadd.f32 %v1021, %v1504
    %1506 = vmatprep.mubr.bf16.mxu0 %v975
    %1507 = vmatmul.mubr.bf16.gmra.mxu0 %v974
    %v1508 = vpop.f32.mrf.mxu0
    %v1509 = vadd.f32 %v1017, %v1508
    %v1510 = vpop.f32.mrf.mxu0
    %v1511 = vadd.f32 %v1021, %v1510
    %v1512 = vpop.f32.mrf.mxu0
    %v1513 = vadd.f32 %v1017, %v1512
    %v1514 = vpop.f32.mrf.mxu0
    %v1515 = vadd.f32 %v1021, %v1514
    %1516 = vmatprep.mubr.bf16.mxu0 %v977
    %1517 = vmatmul.mubr.bf16.gmra.mxu0 %v976
    %v1518 = vpop.f32.mrf.mxu0
    %v1519 = vadd.f32 %v1017, %v1518
    %v1520 = vpop.f32.mrf.mxu0
    %v1521 = vadd.f32 %v1021, %v1520
    %v1522 = vpop.f32.mrf.mxu0
    %v1523 = vadd.f32 %v1017, %v1522
    %v1524 = vpop.f32.mrf.mxu0
    %v1525 = vadd.f32 %v1021, %v1524
    %1526 = vmatprep.mubr.bf16.mxu0 %v979
    %1527 = vmatmul.mubr.bf16.gmra.mxu0 %v978
    %v1528 = vpop.f32.mrf.mxu0
    %v1529 = vadd.f32 %v1017, %v1528
    %v1530 = vpop.f32.mrf.mxu0
    %v1531 = vadd.f32 %v1021, %v1530
    %v1532 = vpop.f32.mrf.mxu0
    %v1533 = vadd.f32 %v1017, %v1532
    %v1534 = vpop.f32.mrf.mxu0
    %v1535 = vadd.f32 %v1021, %v1534
    %1536 = vdwg.mxu0
    %v1537 = vmax.f32 %v1219, 0.0
    %v1538 = vmax.f32 %v1221, 0.0
    %v1539 = vmax.f32 %v1223, 0.0
    %v1540 = vmax.f32 %v1225, 0.0
    %v1541 = vmax.f32 %v1229, 0.0
    %v1542 = vmax.f32 %v1231, 0.0
    %v1543 = vmax.f32 %v1233, 0.0
    %v1544 = vmax.f32 %v1235, 0.0
    %v1545 = vmax.f32 %v1239, 0.0
    %v1546 = vmax.f32 %v1241, 0.0
    %v1547 = vmax.f32 %v1243, 0.0
    %v1548 = vmax.f32 %v1245, 0.0
    %v1549 = vmax.f32 %v1249, 0.0
    %v1550 = vmax.f32 %v1251, 0.0
    %v1551 = vmax.f32 %v1253, 0.0
    %v1552 = vmax.f32 %v1255, 0.0
    %v1553 = vmax.f32 %v1259, 0.0
    %v1554 = vmax.f32 %v1261, 0.0
    %v1555 = vmax.f32 %v1263, 0.0
    %v1556 = vmax.f32 %v1265, 0.0
    %v1557 = vmax.f32 %v1269, 0.0
    %v1558 = vmax.f32 %v1271, 0.0
    %v1559 = vmax.f32 %v1273, 0.0
    %v1560 = vmax.f32 %v1275, 0.0
    %v1561 = vmax.f32 %v1279, 0.0
    %v1562 = vmax.f32 %v1281, 0.0
    %v1563 = vmax.f32 %v1283, 0.0
    %v1564 = vmax.f32 %v1285, 0.0
    %v1565 = vmax.f32 %v1289, 0.0
    %v1566 = vmax.f32 %v1291, 0.0
    %v1567 = vmax.f32 %v1293, 0.0
    %v1568 = vmax.f32 %v1295, 0.0
    %v1569 = vmax.f32 %v1299, 0.0
    %v1570 = vmax.f32 %v1301, 0.0
    %v1571 = vmax.f32 %v1303, 0.0
    %v1572 = vmax.f32 %v1305, 0.0
    %v1573 = vmax.f32 %v1309, 0.0
    %v1574 = vmax.f32 %v1311, 0.0
    %v1575 = vmax.f32 %v1313, 0.0
    %v1576 = vmax.f32 %v1315, 0.0
    %v1577 = vmax.f32 %v1319, 0.0
    %v1578 = vmax.f32 %v1321, 0.0
    %v1579 = vmax.f32 %v1323, 0.0
    %v1580 = vmax.f32 %v1325, 0.0
    %v1581 = vmax.f32 %v1329, 0.0
    %v1582 = vmax.f32 %v1331, 0.0
    %v1583 = vmax.f32 %v1333, 0.0
    %v1584 = vmax.f32 %v1335, 0.0
    %v1585 = vmax.f32 %v1339, 0.0
    %v1586 = vmax.f32 %v1341, 0.0
    %v1587 = vmax.f32 %v1343, 0.0
    %v1588 = vmax.f32 %v1345, 0.0
    %v1589 = vmax.f32 %v1349, 0.0
    %v1590 = vmax.f32 %v1351, 0.0
    %v1591 = vmax.f32 %v1353, 0.0
    %v1592 = vmax.f32 %v1355, 0.0
    %v1593 = vmax.f32 %v1359, 0.0
    %v1594 = vmax.f32 %v1361, 0.0
    %v1595 = vmax.f32 %v1363, 0.0
    %v1596 = vmax.f32 %v1365, 0.0
    %v1597 = vmax.f32 %v1369, 0.0
    %v1598 = vmax.f32 %v1371, 0.0
    %v1599 = vmax.f32 %v1373, 0.0
    %v1600 = vmax.f32 %v1375, 0.0
    %v1601 = vmax.f32 %v1379, 0.0
    %v1602 = vmax.f32 %v1381, 0.0
    %v1603 = vmax.f32 %v1383, 0.0
    %v1604 = vmax.f32 %v1385, 0.0
    %v1605 = vmax.f32 %v1389, 0.0
    %v1606 = vmax.f32 %v1391, 0.0
    %v1607 = vmax.f32 %v1393, 0.0
    %v1608 = vmax.f32 %v1395, 0.0
    %v1609 = vmax.f32 %v1399, 0.0
    %v1610 = vmax.f32 %v1401, 0.0
    %v1611 = vmax.f32 %v1403, 0.0
    %v1612 = vmax.f32 %v1405, 0.0
    %v1613 = vmax.f32 %v1409, 0.0
    %v1614 = vmax.f32 %v1411, 0.0
    %v1615 = vmax.f32 %v1413, 0.0
    %v1616 = vmax.f32 %v1415, 0.0
    %v1617 = vmax.f32 %v1419, 0.0
    %v1618 = vmax.f32 %v1421, 0.0
    %v1619 = vmax.f32 %v1423, 0.0
    %v1620 = vmax.f32 %v1425, 0.0
    %v1621 = vmax.f32 %v1429, 0.0
    %v1622 = vmax.f32 %v1431, 0.0
    %v1623 = vmax.f32 %v1433, 0.0
    %v1624 = vmax.f32 %v1435, 0.0
    %v1625 = vmax.f32 %v1439, 0.0
    %v1626 = vmax.f32 %v1441, 0.0
    %v1627 = vmax.f32 %v1443, 0.0
    %v1628 = vmax.f32 %v1445, 0.0
    %v1629 = vmax.f32 %v1449, 0.0
    %v1630 = vmax.f32 %v1451, 0.0
    %v1631 = vmax.f32 %v1453, 0.0
    %v1632 = vmax.f32 %v1455, 0.0
    %v1633 = vmax.f32 %v1459, 0.0
    %v1634 = vmax.f32 %v1461, 0.0
    %v1635 = vmax.f32 %v1463, 0.0
    %v1636 = vmax.f32 %v1465, 0.0
    %v1637 = vmax.f32 %v1469, 0.0
    %v1638 = vmax.f32 %v1471, 0.0
    %v1639 = vmax.f32 %v1473, 0.0
    %v1640 = vmax.f32 %v1475, 0.0
    %v1641 = vmax.f32 %v1479, 0.0
    %v1642 = vmax.f32 %v1481, 0.0
    %v1643 = vmax.f32 %v1483, 0.0
    %v1644 = vmax.f32 %v1485, 0.0
    %v1645 = vmax.f32 %v1489, 0.0
    %v1646 = vmax.f32 %v1491, 0.0
    %v1647 = vmax.f32 %v1493, 0.0
    %v1648 = vmax.f32 %v1495, 0.0
    %v1649 = vmax.f32 %v1499, 0.0
    %v1650 = vmax.f32 %v1501, 0.0
    %v1651 = vmax.f32 %v1503, 0.0
    %v1652 = vmax.f32 %v1505, 0.0
    %v1653 = vmax.f32 %v1509, 0.0
    %v1654 = vmax.f32 %v1511, 0.0
    %v1655 = vmax.f32 %v1513, 0.0
    %v1656 = vmax.f32 %v1515, 0.0
    %v1657 = vmax.f32 %v1519, 0.0
    %v1658 = vmax.f32 %v1521, 0.0
    %v1659 = vmax.f32 %v1523, 0.0
    %v1660 = vmax.f32 %v1525, 0.0
    %v1661 = vmax.f32 %v1529, 0.0
    %v1662 = vmax.f32 %v1531, 0.0
    %v1663 = vmax.f32 %v1533, 0.0
    %v1664 = vmax.f32 %v1535, 0.0
    %v1665 = vld [vmem:[%s5] sm:$0x3]
    %v1666 = vld [vmem:[#allocation2] sm:$0x1]
    %1668 = vset.pattern.permute.xlu0 0
    %1669 = vperm.xlu0 %1668, %v1666
    %v1670 = vpop.permute.xlu0 %1669
    %v1672 = vlaneseq
    %v1673 = vshrl.u32 %v1672, 7
    %v1674 = vsub.s32 0, %v1673
    %v1675 = vrot.slane %v1670, %v1674
    %v1677 = vlaneseq
    %v1678 = vshrl.u32 %v1677, 7
    %v1679 = vsub.s32 0, %v1678
    %v1680 = vrot.slane %v1665, %v1679
    %v1681 = vlaneseq
    %v1682 = vshrl.u32 %v1681, 7
    %v1683 = vsub.s32 1, %v1682
    %v1684 = vrot.slane %v1665, %v1683
    %1687 = vmatprep.subr.mxu0 %v1568
    %1688 = vmatpush1.xpose.msra.mxu0 %v1567
    %1689 = vmatprep.subr.mxu0 %v1566
    %1690 = vmatpush1.xpose.msra.mxu0 %v1565
    %1691 = vmatprep.subr.mxu0 %v1564
    %1692 = vmatpush1.xpose.msra.mxu0 %v1563
    %1693 = vmatprep.subr.mxu0 %v1562
    %1694 = vmatpush1.xpose.msra.mxu0 %v1561
    %1695 = vmatprep.subr.mxu0 %v1560
    %1696 = vmatpush1.xpose.msra.mxu0 %v1559
    %1697 = vmatprep.subr.mxu0 %v1558
    %1698 = vmatpush1.xpose.msra.mxu0 %v1557
    %1699 = vmatprep.subr.mxu0 %v1556
    %1700 = vmatpush1.xpose.msra.mxu0 %v1555
    %1701 = vmatprep.subr.mxu0 %v1554
    %1702 = vmatpush1.xpose.msra.mxu0 %v1553
    %1703 = vmatprep.subr.mxu0 %v1552
    %1704 = vmatpush1.xpose.msra.mxu0 %v1551
    %1705 = vmatprep.subr.mxu0 %v1550
    %1706 = vmatpush1.xpose.msra.mxu0 %v1549
    %1707 = vmatprep.subr.mxu0 %v1548
    %1708 = vmatpush1.xpose.msra.mxu0 %v1547
    %1709 = vmatprep.subr.mxu0 %v1546
    %1710 = vmatpush1.xpose.msra.mxu0 %v1545
    %1711 = vmatprep.subr.mxu0 %v1544
    %1712 = vmatpush1.xpose.msra.mxu0 %v1543
    %1713 = vmatprep.subr.mxu0 %v1542
    %1714 = vmatpush1.xpose.msra.mxu0 %v1541
    %1715 = vmatprep.subr.mxu0 %v1540
    %1716 = vmatpush1.xpose.msra.mxu0 %v1539
    %1717 = vmatprep.subr.mxu0 %v1538
    %1718 = vmatpush1.xpose.msra.mxu0 %v1537
    %1719 = vmatprep.subr.mxu0 %v1600
    %1720 = vmatpush2.xpose.msra.mxu0 %v1599
    %1721 = vmatprep.subr.mxu0 %v1598
    %1722 = vmatpush2.xpose.msra.mxu0 %v1597
    %1723 = vmatprep.subr.mxu0 %v1596
    %1724 = vmatpush2.xpose.msra.mxu0 %v1595
    %1725 = vmatprep.subr.mxu0 %v1594
    %1726 = vmatpush2.xpose.msra.mxu0 %v1593
    %1727 = vmatprep.subr.mxu0 %v1592
    %1728 = vmatpush2.xpose.msra.mxu0 %v1591
    %1729 = vmatprep.subr.mxu0 %v1590
    %1730 = vmatpush2.xpose.msra.mxu0 %v1589
    %1731 = vmatprep.subr.mxu0 %v1588
    %1732 = vmatpush2.xpose.msra.mxu0 %v1587
    %1733 = vmatprep.subr.mxu0 %v1586
    %1734 = vmatpush2.xpose.msra.mxu0 %v1585
    %1735 = vmatprep.subr.mxu0 %v1584
    %1736 = vmatpush2.xpose.msra.mxu0 %v1583
    %1737 = vmatprep.subr.mxu0 %v1582
    %1738 = vmatpush2.xpose.msra.mxu0 %v1581
    %1739 = vmatprep.subr.mxu0 %v1580
    %1740 = vmatpush2.xpose.msra.mxu0 %v1579
    %1741 = vmatprep.subr.mxu0 %v1578
    %1742 = vmatpush2.xpose.msra.mxu0 %v1577
    %1743 = vmatprep.subr.mxu0 %v1576
    %1744 = vmatpush2.xpose.msra.mxu0 %v1575
    %1745 = vmatprep.subr.mxu0 %v1574
    %1746 = vmatpush2.xpose.msra.mxu0 %v1573
    %1747 = vmatprep.subr.mxu0 %v1572
    %1748 = vmatpush2.xpose.msra.mxu0 %v1571
    %1749 = vmatprep.subr.mxu0 %v1570
    %1750 = vmatpush2.xpose.msra.mxu0 %v1569
    %1751 = vmatprep.mubr.f32.mxu0 %v1684
    %1752 = vmatmul.mubr.f32.gmra.mxu0 %v1680
    %v1753 = vpop.f32.mrf.mxu0
    %v1754 = vadd.f32 %v1675, %v1753
    %v1755 = vpop.f32.mrf.mxu0
    %v1756 = vadd.f32 %v1675, %v1755
    %1757 = vdwg.mxu0
    %1758 = vmatprep.subr.mxu0 %v1632
    %1759 = vmatpush1.xpose.msra.mxu0 %v1631
    %1760 = vmatprep.subr.mxu0 %v1630
    %1761 = vmatpush1.xpose.msra.mxu0 %v1629
    %1762 = vmatprep.subr.mxu0 %v1628
    %1763 = vmatpush1.xpose.msra.mxu0 %v1627
    %1764 = vmatprep.subr.mxu0 %v1626
    %1765 = vmatpush1.xpose.msra.mxu0 %v1625
    %1766 = vmatprep.subr.mxu0 %v1624
    %1767 = vmatpush1.xpose.msra.mxu0 %v1623
    %1768 = vmatprep.subr.mxu0 %v1622
    %1769 = vmatpush1.xpose.msra.mxu0 %v1621
    %1770 = vmatprep.subr.mxu0 %v1620
    %1771 = vmatpush1.xpose.msra.mxu0 %v1619
    %1772 = vmatprep.subr.mxu0 %v1618
    %1773 = vmatpush1.xpose.msra.mxu0 %v1617
    %1774 = vmatprep.subr.mxu0 %v1616
    %1775 = vmatpush1.xpose.msra.mxu0 %v1615
    %1776 = vmatprep.subr.mxu0 %v1614
    %1777 = vmatpush1.xpose.msra.mxu0 %v1613
    %1778 = vmatprep.subr.mxu0 %v1612
    %1779 = vmatpush1.xpose.msra.mxu0 %v1611
    %1780 = vmatprep.subr.mxu0 %v1610
    %1781 = vmatpush1.xpose.msra.mxu0 %v1609
    %1782 = vmatprep.subr.mxu0 %v1608
    %1783 = vmatpush1.xpose.msra.mxu0 %v1607
    %1784 = vmatprep.subr.mxu0 %v1606
    %1785 = vmatpush1.xpose.msra.mxu0 %v1605
    %1786 = vmatprep.subr.mxu0 %v1604
    %1787 = vmatpush1.xpose.msra.mxu0 %v1603
    %1788 = vmatprep.subr.mxu0 %v1602
    %1789 = vmatpush1.xpose.msra.mxu0 %v1601
    %1790 = vmatprep.subr.mxu0 %v1664
    %1791 = vmatpush2.xpose.msra.mxu0 %v1663
    %1792 = vmatprep.subr.mxu0 %v1662
    %1793 = vmatpush2.xpose.msra.mxu0 %v1661
    %1794 = vmatprep.subr.mxu0 %v1660
    %1795 = vmatpush2.xpose.msra.mxu0 %v1659
    %1796 = vmatprep.subr.mxu0 %v1658
    %1797 = vmatpush2.xpose.msra.mxu0 %v1657
    %1798 = vmatprep.subr.mxu0 %v1656
    %1799 = vmatpush2.xpose.msra.mxu0 %v1655
    %1800 = vmatprep.subr.mxu0 %v1654
    %1801 = vmatpush2.xpose.msra.mxu0 %v1653
    %1802 = vmatprep.subr.mxu0 %v1652
    %1803 = vmatpush2.xpose.msra.mxu0 %v1651
    %1804 = vmatprep.subr.mxu0 %v1650
    %1805 = vmatpush2.xpose.msra.mxu0 %v1649
    %1806 = vmatprep.subr.mxu0 %v1648
    %1807 = vmatpush2.xpose.msra.mxu0 %v1647
    %1808 = vmatprep.subr.mxu0 %v1646
    %1809 = vmatpush2.xpose.msra.mxu0 %v1645
    %1810 = vmatprep.subr.mxu0 %v1644
    %1811 = vmatpush2.xpose.msra.mxu0 %v1643
    %1812 = vmatprep.subr.mxu0 %v1642
    %1813 = vmatpush2.xpose.msra.mxu0 %v1641
    %1814 = vmatprep.subr.mxu0 %v1640
    %1815 = vmatpush2.xpose.msra.mxu0 %v1639
    %1816 = vmatprep.subr.mxu0 %v1638
    %1817 = vmatpush2.xpose.msra.mxu0 %v1637
    %1818 = vmatprep.subr.mxu0 %v1636
    %1819 = vmatpush2.xpose.msra.mxu0 %v1635
    %1820 = vmatprep.subr.mxu0 %v1634
    %1821 = vmatpush2.xpose.msra.mxu0 %v1633
    %1822 = vmatprep.mubr.f32.mxu0 %v1684
    %1823 = vmatmul.mubr.f32.gmra.mxu0 %v1680
    %v1824 = vpop.f32.mrf.mxu0
    %v1825 = vadd.f32 %v1675, %v1824
    %v1826 = vpop.f32.mrf.mxu0
    %v1827 = vadd.f32 %v1675, %v1826
    %1828 = vdwg.mxu0
    %v1829 = vtanh.pop %v1754
    %v1830 = vtanh.pop %v1756
    %v1831 = vtanh.pop %v1825
    %v1832 = vtanh.pop %v1827
    %v1833 = vmul.f32 %v1829, 2.0
    %v1834 = vmul.f32 %v1830, 2.0
    %v1835 = vmul.f32 %v1831, 2.0
    %v1836 = vmul.f32 %v1832, 2.0
    %v1837 = vadd.f32 %v1833, 0.0
    %v1838 = vadd.f32 %v1834, 0.0
    %v1839 = vadd.f32 %v1835, 0.0
    %v1840 = vadd.f32 %v1836, 0.0
    %v1845 = vcombine.low %v1837, %v1838
    %v1846 = vcombine.low %v1839, %v1840
    %v1848 = vunpack.c.l.s4 1966171168
    %v1849 = vunpack.c.0.s8 %v1848
    %v1850 = vlaneseq
    %v1851 = vshrl.u32 %v1850, 7
    %v1852 = vsub.s32 %v1849, %v1851
    %v1853 = vrot.slane %v1845, %v1852
    %v1855 = vunpack.c.l.s4 1966171168
    %v1856 = vunpack.c.0.s8 %v1855
    %v1857 = vlaneseq
    %v1858 = vshrl.u32 %v1857, 7
    %v1859 = vsub.s32 %v1856, %v1858
    %v1860 = vrot.slane %v1846, %v1859
    %v1861 = vcombine.low %v1853, %v1860
    %v1863 = vunpack.c.l.s4 1966171168
    %v1864 = vunpack.c.0.s8 %v1863
    %v1865 = vlaneseq
    %v1866 = vshrl.u32 %v1865, 7
    %v1867 = vsub.s32 %v1864, %v1866
    %v1868 = vrot.slane %v1861, %v1867
    %v1870 = vlaneseq
    %vm1871 = vcmp.ge.s32.totalorder %v1870, 0
    %vm1872 = vcmp.lt.s32.totalorder %v1870, 512
    %vm1873 = vmand %vm1871, %vm1872
    %1874 = vst.msk [vmem:[#allocation9] sm:$0xf] %vm1873, %v1868
    // Predicated region
    $region42: #{tpu_custom_call.1} parent=1 // pred_check
      _
    $region43: #{tpu_custom_call.1} parent=1 // pred_check_branch
      %1876 = sbr.rel (0) target = $region45
    $region44: #{tpu_custom_call.1} parent=1 // pred_region
      %s1878 = ssub.s32 64, 64
      %1879 = vsyncadd [#allocation5], %s1878
      %s1881 = sshll.u32 [#allocation9], 4
      %s1882 = int_to_ptr.vmem [resolvable:$true] %s1881
      %1884 = dma.vmem_to_hbm [thread:$0]  %s1882, 64, %s7, [#allocation5]
    $region45: #{tpu_custom_call.1} parent=1 // pred_fallthru
      _
    // Predicated region
    $region46: #{tpu_custom_call.1} parent=1 // pred_check
      _
    $region47: #{tpu_custom_call.1} parent=1 // pred_check_branch
      %1886 = sbr.rel (0) target = $region49
    $region48: #{tpu_custom_call.1} parent=1 // pred_region
      %1887 = dma.done [#allocation5], 64
    $region49: #{tpu_custom_call.1} parent=1 // pred_fallthru
      _
    %1888 = vsyncpa [#allocation4], 1
    %1889 = vsyncpa [#allocation7], 1
    %1890 = vsyncpa [#allocation5], 1

</llo_original>
